<compile_context>
chip_gen: v5e
topology: v5e:2x2
jax: 0.10.0
libtpu: 0.0.40
codegen_flags: <defaults>
</compile_context>

<pallas_src>
import functools

import jax
import jax.numpy as jnp
from jax.experimental import pallas as pl
from jax.experimental.pallas import tpu as pltpu


# ---------------------------------------------------------------------------
# helpers
# ---------------------------------------------------------------------------

def _cdiv(a, b):
    return -(-a // b)


def _round_up(x, m):
    return _cdiv(x, m) * m


def _plan_axis(n, tile_max, grain, min_tiles=1):
    """Pick (tile, padded_n) with tile % grain == 0, padded_n = tile * num_tiles,
    and minimal padding (no blow-up to a multiple of tile_max)."""
    n = max(int(n), 1)
    n_grain = _round_up(n, grain)
    grains = n_grain // grain
    num_tiles = max(min_tiles, _cdiv(n_grain, tile_max))
    num_tiles = min(num_tiles, grains)
    tile = grain * _cdiv(grains, num_tiles)
    return tile, tile * num_tiles


# ---------------------------------------------------------------------------
# Pallas kernel: fused SAGEConv layer (+ optional ReLU / log_softmax epilogue)
# ---------------------------------------------------------------------------

def _sage_layer_kernel(apply_relu, apply_log_softmax, out_valid, slab,
                       a_ref, x_ref, xt_ref, invdeg_ref, wl_ref, wr_ref, b_ref,
                       o_ref, acc_ref):
    k = pl.program_id(1)

    # --- init fp32 accumulator for the aggregation ---
    @pl.when(k == 0)
    def _():
        acc_ref[...] = jnp.zeros_like(acc_ref)

    # --- accumulate A(int8 counts -> bf16) @ X(bf16) in fp32 over the K axis ---
    a = a_ref[...].astype(jnp.bfloat16)          # upcast hides under the A DMA
    acc_ref[...] += jnp.dot(a, x_ref[...], preferred_element_type=jnp.float32)

    # --- epilogue only on the last K step (projections hoisted out of K loop) ---
    @pl.when(k == pl.num_programs(1) - 1)
    def _():
        wl = wl_ref[...]
        wr = wr_ref[...]
        bias = b_ref[...]
        tm = acc_ref.shape[0]
        # Process in sublane slabs so fp32 temporaries stay well under the
        # 64-vreg file even for large tm tiles.
        for s0 in range(0, tm, slab):
            sz = min(slab, tm - s0)
            agg = (acc_ref[s0:s0 + sz, :]
                   * invdeg_ref[s0:s0 + sz, :]).astype(jnp.bfloat16)   # exact mean
            out = (jnp.dot(agg, wl, preferred_element_type=jnp.float32)
                   + jnp.dot(xt_ref[s0:s0 + sz, :], wr,
                             preferred_element_type=jnp.float32)
                   + bias)                                             # fp32

            if apply_relu:
                out = jnp.maximum(out, 0.0)

            if apply_log_softmax:
                # masked (lane-padded) numerically-stable log_softmax
                col = jax.lax.broadcasted_iota(jnp.int32, out.shape, 1)
                valid = col < out_valid
                masked = jnp.where(valid, out, -jnp.inf)
                m = jnp.max(masked, axis=-1, keepdims=True)
                e = jnp.where(valid, jnp.exp(out - m), 0.0)
                s = jnp.sum(e, axis=-1, keepdims=True)
                out = out - m - jnp.log(s)

            o_ref[s0:s0 + sz, :] = out.astype(o_ref.dtype)


# ---------------------------------------------------------------------------
# Per-layer wrapper
# ---------------------------------------------------------------------------

def sage_layer(edge_index, n_src, n_dst, x, w_l, w_r, b, *,
               apply_relu, apply_log_softmax, out_dtype,
               tm_max=512, tk_max=2048):
    """One SAGEConv layer:  act((A @ X) / deg @ W_l + X_target @ W_r + b)."""
    c_in = x.shape[1]
    c_out = w_l.shape[1]
    c_out_pad = _round_up(c_out, 128)          # lane-dense output stores

    # M grain = 32 keeps int8 sublane tiling happy; >=2 M tiles for v7x 2-TC.
    tm, n_dst_pad = _plan_axis(n_dst, tm_max, 32, min_tiles=2)
    tk, n_src_pad = _plan_axis(n_src, tk_max, 128, min_tiles=1)

    src, dst = edge_index[0], edge_index[1]

    # Dense edge-count matrix built directly at padded shape & int8 target
    # dtype (single scatter, no extra pad/cast pass over the dense matrix).
    a_p = jnp.zeros((n_dst_pad, n_src_pad), jnp.int8).at[dst, src].add(1)
    deg = jnp.zeros((n_dst_pad, 1), jnp.float32).at[dst, 0].add(1.0)
    inv_deg = 1.0 / jnp.maximum(deg, 1.0)      # exact fp32 reciprocal

    # Activations / weights: true c_in (no 128 padding), bf16 MXU operands.
    x_p = jnp.pad(x.astype(jnp.bfloat16), ((0, n_src_pad - x.shape[0]), (0, 0)))
    xt_p = jnp.pad(x[:n_dst].astype(jnp.bfloat16),
                   ((0, n_dst_pad - n_dst), (0, 0)))
    wl_p = jnp.pad(w_l, ((0, 0), (0, c_out_pad - c_out))).astype(jnp.bfloat16)
    wr_p = jnp.pad(w_r, ((0, 0), (0, c_out_pad - c_out))).astype(jnp.bfloat16)
    b_p = jnp.pad(b, (0, c_out_pad - c_out)).reshape(1, c_out_pad).astype(jnp.float32)

    grid = (n_dst_pad // tm, n_src_pad // tk)
    slab = min(tm, 256)

    kernel = functools.partial(_sage_layer_kernel,
                               apply_relu, apply_log_softmax, int(c_out), slab)

    out_bytes = n_dst_pad * c_out_pad * jnp.dtype(out_dtype).itemsize
    ce = pl.CostEstimate(
        flops=2 * n_dst_pad * n_src_pad * c_in
              + 4 * n_dst_pad * c_in * c_out_pad,
        transcendentals=(n_dst_pad * c_out_pad) if apply_log_softmax else 0,
        bytes_accessed=(a_p.size                                  # int8
                        + grid[0] * x_p.size * 2                  # X re-streamed per M tile
                        + xt_p.size * 2 + wl_p.size * 2 + wr_p.size * 2
                        + b_p.size * 4 + inv_deg.size * 4 + out_bytes),
    )

    grid_spec = pltpu.PrefetchScalarGridSpec(
        num_scalar_prefetch=0,
        grid=grid,
        in_specs=[
            pl.BlockSpec((tm, tk), lambda i, k: (i, k)),           # A (int8 counts)
            pl.BlockSpec((tk, c_in), lambda i, k: (k, 0)),         # X
            pl.BlockSpec((tm, c_in), lambda i, k: (i, 0)),         # X_target
            pl.BlockSpec((tm, 1), lambda i, k: (i, 0)),            # 1/deg (fp32)
            pl.BlockSpec((c_in, c_out_pad), lambda i, k: (0, 0)),  # W_l
            pl.BlockSpec((c_in, c_out_pad), lambda i, k: (0, 0)),  # W_r
            pl.BlockSpec((1, c_out_pad), lambda i, k: (0, 0)),     # bias
        ],
        out_specs=pl.BlockSpec((tm, c_out_pad), lambda i, k: (i, 0)),
        scratch_shapes=[pltpu.VMEM((tm, c_in), jnp.float32)],
    )

    out = pl.pallas_call(
        kernel,
        out_shape=jax.ShapeDtypeStruct((n_dst_pad, c_out_pad), out_dtype),
        grid_spec=grid_spec,
        compiler_params=pltpu.CompilerParams(
            dimension_semantics=("parallel", "arbitrary"),
            vmem_limit_bytes=32 * 1024 * 1024),   # safe on v5e/v6e/v7x; footprint ~few MiB
        cost_estimate=ce,
    )(a_p, x_p, xt_p, inv_deg, wl_p, wr_p, b_p)

    return out[:n_dst, :c_out]


# ---------------------------------------------------------------------------
# Glue (plain JAX): parameters and layer loop
# ---------------------------------------------------------------------------

def init_params(key, in_ch, hid, out_ch, num_layers):
    sizes = [(in_ch, hid)] + [(hid, hid)] * (num_layers - 2) + [(hid, out_ch)]
    params = []
    for cin, cout in sizes:
        key, k1, k2 = jax.random.split(key, 3)
        scale = 1.0 / jnp.sqrt(jnp.float32(cin))
        w_l = jax.random.uniform(k1, (cin, cout), jnp.float32, -scale, scale)
        w_r = jax.random.uniform(k2, (cin, cout), jnp.float32, -scale, scale)
        b = jnp.zeros((cout,), jnp.float32)
        params.append((w_l, w_r, b))
    return params


def sage_forward(x, adjs, params):
    """Mirrors SAGE.forward: per-layer SAGEConv, ReLU on all but last,
    log_softmax fused into the last layer's kernel epilogue."""
    num_layers = len(params)
    for i, (edge_index, size) in enumerate(adjs):
        n_src, n_dst = size
        w_l, w_r, b = params[i]
        last = (i == num_layers - 1)
        x = sage_layer(edge_index, n_src, n_dst, x, w_l, w_r, b,
                       apply_relu=not last,
                       apply_log_softmax=last,
                       out_dtype=jnp.float32 if last else jnp.bfloat16)
    return x


# ---------------------------------------------------------------------------
# Main
# ---------------------------------------------------------------------------

if __name__ == "__main__":
    key = jax.random.PRNGKey(0)

    in_channels, hidden_channels, out_channels = 64, 64, 47
    num_layers = 3
    # node counts per sampling hop: layer i maps node_counts[i] src -> node_counts[i+1] dst
    node_counts = [640, 320, 160, 80]
    fanout = 8

    key, kx = jax.random.split(key)
    x = jax.random.normal(kx, (node_counts[0], in_channels), jnp.float32)

    # Deterministic synthetic "adjs" (edge_index, size) like NeighborSampler yields.
    adjs = []
    for i in range(num_layers):
        n_src, n_dst = node_counts[i], node_counts[i + 1]
        key, ke = jax.random.split(key)
        src = jax.random.randint(ke, (n_dst * fanout,), 0, n_src, jnp.int32)
        dst = jnp.repeat(jnp.arange(n_dst, dtype=jnp.int32), fanout)
        edge_index = jnp.stack([src, dst], axis=0)  # [2, E]
        adjs.append((edge_index, (n_src, n_dst)))

    key, kp = jax.random.split(key)
    params = init_params(kp, in_channels, hidden_channels, out_channels,
                         num_layers)

    out = sage_forward(x, adjs, params)
    out = jax.block_until_ready(out)
    assert out.shape == (node_counts[-1], out_channels)
    assert bool(jnp.all(jnp.isfinite(out)))
    print("KERNEL_OK")
</pallas_src>

<mosaic_0001>
module attributes {stable_mosaic.version = 11 : i64} {
  func.func @_sage_layer_kernel(%arg0: i32, %arg1: i32, %arg2: memref<160x640xi8, #tpu.memory_space<vmem>>, %arg3: memref<640x64xbf16, #tpu.memory_space<vmem>>, %arg4: memref<160x64xbf16, #tpu.memory_space<vmem>>, %arg5: memref<160x1xf32, #tpu.memory_space<vmem>>, %arg6: memref<64x128xbf16, #tpu.memory_space<vmem>>, %arg7: memref<64x128xbf16, #tpu.memory_space<vmem>>, %arg8: memref<1x128xf32, #tpu.memory_space<vmem>>, %arg9: memref<160x128xbf16, #tpu.memory_space<vmem>>, %arg10: memref<160x64xf32, #tpu.memory_space<vmem>>) attributes {dimension_semantics = [#tpu.dimension_semantics<parallel>, #tpu.dimension_semantics<arbitrary>], iteration_bounds = array<i64: 2, 1>, scalar_prefetch = 0 : i64, scratch_operands = 1 : i64, tpu.core_type = #tpu.core_type<tc>, window_params = [{transform_indices = @transform_0, window_bounds = array<i64: 160, 640>}, {transform_indices = @transform_1, window_bounds = array<i64: 640, 64>}, {transform_indices = @transform_2, window_bounds = array<i64: 160, 64>}, {transform_indices = @transform_3, window_bounds = array<i64: 160, 1>}, {pipeline_mode = #tpu.pipeline_mode<synchronous>, transform_indices = @transform_4, window_bounds = array<i64: 64, 128>}, {pipeline_mode = #tpu.pipeline_mode<synchronous>, transform_indices = @transform_5, window_bounds = array<i64: 64, 128>}, {pipeline_mode = #tpu.pipeline_mode<synchronous>, transform_indices = @transform_6, window_bounds = array<i64: 1, 128>}, {transform_indices = @transform_7, window_bounds = array<i64: 160, 128>}]} {
    %c0_i32 = arith.constant 0 : i32
    %0 = arith.cmpi eq, %arg1, %c0_i32 : i32
    %1 = arith.extui %0 : i1 to i32
    %c0_i32_0 = arith.constant 0 : i32
    %2 = arith.cmpi ne, %1, %c0_i32_0 : i32
    scf.if %2 {
      %cst_10 = arith.constant 0.000000e+00 : f32
      %13 = vector.broadcast %cst_10 : f32 to vector<160x64xf32>
      %c0_11 = arith.constant 0 : index
      %c0_12 = arith.constant 0 : index
      %14 = vector.load %arg10[%c0_11, %c0_12] : memref<160x64xf32, #tpu.memory_space<vmem>>, vector<160x64xf32>
      tpu.vector_store %arg10[%c0_11, %c0_12], %13 {strides = array<i32>} : memref<160x64xf32, #tpu.memory_space<vmem>>, vector<160x64xf32>,
    } else {
    }
    %c0 = arith.constant 0 : index
    %c0_1 = arith.constant 0 : index
    %3 = vector.load %arg2[%c0, %c0_1] : memref<160x640xi8, #tpu.memory_space<vmem>>, vector<160x640xi8>
    %4 = arith.sitofp %3 : vector<160x640xi8> to vector<160x640xbf16>
    %c0_2 = arith.constant 0 : index
    %c0_3 = arith.constant 0 : index
    %5 = vector.load %arg10[%c0_2, %c0_3] : memref<160x64xf32, #tpu.memory_space<vmem>>, vector<160x64xf32>
    %c0_4 = arith.constant 0 : index
    %c0_5 = arith.constant 0 : index
    %6 = vector.load %arg3[%c0_4, %c0_5] : memref<640x64xbf16, #tpu.memory_space<vmem>>, vector<640x64xbf16>
    %cst = arith.constant dense<0.000000e+00> : vector<160x64xf32>
    %7 = tpu.matmul %4, %6, %cst {dimension_numbers = #tpu.dot_dimension_numbers<[1], [0], [0], [1], [0, 0, 1, 1], [], []>} : vector<160x640xbf16>, vector<640x64xbf16>, vector<160x64xf32> -> vector<160x64xf32>
    %8 = arith.addf %5, %7 : vector<160x64xf32>
    %c0_6 = arith.constant 0 : index
    %c0_7 = arith.constant 0 : index
    %9 = vector.load %arg10[%c0_6, %c0_7] : memref<160x64xf32, #tpu.memory_space<vmem>>, vector<160x64xf32>
    tpu.vector_store %arg10[%c0_6, %c0_7], %8 {strides = array<i32>} : memref<160x64xf32, #tpu.memory_space<vmem>>, vector<160x64xf32>,
    %c0_i32_8 = arith.constant 0 : i32
    %10 = arith.cmpi eq, %arg1, %c0_i32_8 : i32
    %11 = arith.extui %10 : i1 to i32
    %c0_i32_9 = arith.constant 0 : i32
    %12 = arith.cmpi ne, %11, %c0_i32_9 : i32
    scf.if %12 {
      %c0_10 = arith.constant 0 : index
      %c0_11 = arith.constant 0 : index
      %13 = vector.load %arg6[%c0_10, %c0_11] : memref<64x128xbf16, #tpu.memory_space<vmem>>, vector<64x128xbf16>
      %c0_12 = arith.constant 0 : index
      %c0_13 = arith.constant 0 : index
      %14 = vector.load %arg7[%c0_12, %c0_13] : memref<64x128xbf16, #tpu.memory_space<vmem>>, vector<64x128xbf16>
      %c0_14 = arith.constant 0 : index
      %c0_15 = arith.constant 0 : index
      %15 = vector.load %arg8[%c0_14, %c0_15] : memref<1x128xf32, #tpu.memory_space<vmem>>, vector<1x128xf32>
      %c0_16 = arith.constant 0 : index
      %c0_17 = arith.constant 0 : index
      %16 = vector.load %arg10[%c0_16, %c0_17] : memref<160x64xf32, #tpu.memory_space<vmem>>, vector<160x64xf32>
      %c0_18 = arith.constant 0 : index
      %c0_19 = arith.constant 0 : index
      %17 = vector.load %arg5[%c0_18, %c0_19] : memref<160x1xf32, #tpu.memory_space<vmem>>, vector<160x1xf32>
      %18 = vector.broadcast %17 : vector<160x1xf32> to vector<160x64xf32>
      %19 = arith.mulf %16, %18 : vector<160x64xf32>
      %20 = arith.truncf %19 : vector<160x64xf32> to vector<160x64xbf16>
      %cst_20 = arith.constant dense<0.000000e+00> : vector<160x128xf32>
      %21 = tpu.matmul %20, %13, %cst_20 {dimension_numbers = #tpu.dot_dimension_numbers<[1], [0], [0], [1], [0, 0, 1, 1], [], []>} : vector<160x64xbf16>, vector<64x128xbf16>, vector<160x128xf32> -> vector<160x128xf32>
      %c0_21 = arith.constant 0 : index
      %c0_22 = arith.constant 0 : index
      %22 = vector.load %arg4[%c0_21, %c0_22] : memref<160x64xbf16, #tpu.memory_space<vmem>>, vector<160x64xbf16>
      %cst_23 = arith.constant dense<0.000000e+00> : vector<160x128xf32>
      %23 = tpu.matmul %22, %14, %cst_23 {dimension_numbers = #tpu.dot_dimension_numbers<[1], [0], [0], [1], [0, 0, 1, 1], [], []>} : vector<160x64xbf16>, vector<64x128xbf16>, vector<160x128xf32> -> vector<160x128xf32>
      %24 = arith.addf %21, %23 : vector<160x128xf32>
      %25 = vector.broadcast %15 : vector<1x128xf32> to vector<160x128xf32>
      %26 = arith.addf %24, %25 : vector<160x128xf32>
      %cst_24 = arith.constant 0.000000e+00 : f32
      %27 = vector.broadcast %cst_24 : f32 to vector<160x128xf32>
      %28 = arith.maximumf %26, %27 : vector<160x128xf32>
      %29 = arith.truncf %28 : vector<160x128xf32> to vector<160x128xbf16>
      %c0_25 = arith.constant 0 : index
      %c0_26 = arith.constant 0 : index
      %30 = vector.load %arg9[%c0_25, %c0_26] : memref<160x128xbf16, #tpu.memory_space<vmem>>, vector<160x128xbf16>
      tpu.vector_store %arg9[%c0_25, %c0_26], %29 {strides = array<i32>} : memref<160x128xbf16, #tpu.memory_space<vmem>>, vector<160x128xbf16>,
    } else {
    }
    return
  }
  func.func @transform_0(%arg0: i32, %arg1: i32) -> (i32, i32) {
    %c0_i32 = arith.constant 0 : i32
    return %arg0, %arg1 : i32, i32
  }
  func.func @transform_1(%arg0: i32, %arg1: i32) -> (i32, i32) {
    %c0_i32 = arith.constant 0 : i32
    %c0_i32_0 = arith.constant 0 : i32
    return %arg1, %c0_i32 : i32, i32
  }
  func.func @transform_2(%arg0: i32, %arg1: i32) -> (i32, i32) {
    %c0_i32 = arith.constant 0 : i32
    %c0_i32_0 = arith.constant 0 : i32
    return %arg0, %c0_i32 : i32, i32
  }
  func.func @transform_3(%arg0: i32, %arg1: i32) -> (i32, i32) {
    %c0_i32 = arith.constant 0 : i32
    %c0_i32_0 = arith.constant 0 : i32
    return %arg0, %c0_i32 : i32, i32
  }
  func.func @transform_4(%arg0: i32, %arg1: i32) -> (i32, i32) {
    %c0_i32 = arith.constant 0 : i32
    %c0_i32_0 = arith.constant 0 : i32
    %c0_i32_1 = arith.constant 0 : i32
    return %c0_i32, %c0_i32_0 : i32, i32
  }
  func.func @transform_5(%arg0: i32, %arg1: i32) -> (i32, i32) {
    %c0_i32 = arith.constant 0 : i32
    %c0_i32_0 = arith.constant 0 : i32
    %c0_i32_1 = arith.constant 0 : i32
    return %c0_i32, %c0_i32_0 : i32, i32
  }
  func.func @transform_6(%arg0: i32, %arg1: i32) -> (i32, i32) {
    %c0_i32 = arith.constant 0 : i32
    %c0_i32_0 = arith.constant 0 : i32
    %c0_i32_1 = arith.constant 0 : i32
    return %c0_i32, %c0_i32_0 : i32, i32
  }
  func.func @transform_7(%arg0: i32, %arg1: i32) -> (i32, i32) {
    %c0_i32 = arith.constant 0 : i32
    %c0_i32_0 = arith.constant 0 : i32
    return %arg0, %c0_i32 : i32, i32
  }
}

</mosaic_0001>

<llo_original>
// kernel: tpu_custom_call.1
$region0: #{tpu_custom_call.1}
  #allocation0 [shape = 'u32[]', space=smem, size = 0x4, offset = 0x4, fixed_abs, tag = 'smem constant byte address 0x4 - core index']
  #allocation1 [shape = 'u32[72,128]{1,0:T(1,128)}', space=vmem, size = 0x9000, scoped, tag = 'internal scratch']
  #allocation2 [shape = 'f32[160,64]{1,0:T(8,128)}', space=vmem, size = 0x14000, scoped, tag = 'scratch operand']
  %s0 = inlined_call_operand.vmem [shape: s8[320,640], index: 0, kind: input, shape index: {}]
  %s1 = inlined_call_operand.vmem [shape: bf16[640,64], index: 1, kind: input, shape index: {}]
  %s2 = inlined_call_operand.vmem [shape: bf16[320,64], index: 2, kind: input, shape index: {}]
  %s3 = inlined_call_operand.vmem [shape: f32[320,1], index: 3, kind: input, shape index: {}]
  %s4 = inlined_call_operand.vmem [shape: bf16[64,128], index: 4, kind: input, shape index: {}]
  %s5 = inlined_call_operand.vmem [shape: bf16[64,128], index: 5, kind: input, shape index: {}]
  %s6 = inlined_call_operand.vmem [shape: f32[1,128], index: 6, kind: input, shape index: {}]
  %s7 = inlined_call_operand.hbm [shape: bf16[320,128], index: 7, kind: output, shape index: {}]
  %s8 = sld [smem:[#allocation0]]
  $region69: #{tpu_custom_call.1} parent=0
    _
  %s10 = ssub.s32 1, %s8
  %s11 = scalar_select 0, %s10, %s8
  $region1: #{tpu_custom_call.1} parent=0
    #allocation3 [shape = 'u8[81920]{0}', space=vmem, size = 0x14000, scoped, tag = 'output window, operand 0']
    #allocation4 [shape = 's32[2]{0}', space=sflag, size = 0x8, scoped, tag = 'scoped memory for tpu_custom_call.1']
    %12 = vsyncpa [#allocation4], 0
    %s13 = scalar_lea.sflag [#allocation4], 1
    %14 = vsyncpa %s13, 0
    loop: start=0, step=1, limit=4
    $region2: #{tpu_custom_call.1} parent=1 // loop_pre_header
      _
    $region3: #{tpu_custom_call.1} parent=1 // loop_header
      %s16 = sphi 0, %s20
      %p17 = scmp.ge.s32.totalorder %s16, 4
      %s23 = sphi 0, %s35
      %s24 = sphi 0, %s31
      %s25 = sphi 0, %s23
      %s26 = sphi 0, %s24
      %s27 = sphi 0, %s25
      %s28 = sphi 0, %s26
      %s40 = sphi 0, %s42
      %s43 = sphi 0, %s40
      %s44 = sphi 0, %s43
      %s60 = sphi 0, %s44
      %s66 = sphi 0, %s68
      %s69 = sphi 0, %s66
      %s70 = sphi 0, %s69
      %s86 = sphi 0, %s70
      %s92 = sphi 0, %s94
      %s95 = sphi 0, %s92
      %s96 = sphi 0, %s95
      %s112 = sphi 0, %s96
      %s118 = sphi 0, %s120
      %s121 = sphi 0, %s118
      %s122 = sphi 0, %s121
      %s138 = sphi 0, %s122
      %s142 = sphi 0, %s142
      %s144 = sphi 0, %s142
      %s145 = sphi 0, %s144
      %s159 = sphi 0, %s145
      %s163 = sphi 0, %s163
      %s165 = sphi 0, %s163
      %s166 = sphi 0, %s165
      %s180 = sphi 0, %s166
      %s184 = sphi 0, %s184
      %s186 = sphi 0, %s184
      %s187 = sphi 0, %s186
      %s201 = sphi 0, %s187
      %s207 = sphi 0, %s209
      %s210 = sphi 0, %s207
      %s211 = sphi 0, %s210
      %s227 = sphi 0, %s211
    $region4: #{tpu_custom_call.1} parent=1 // loop_header_branch
      %19 = sbr.rel (%p17) target = $region8
    $region5: #{tpu_custom_call.1} parent=1 // loop_body
      %s21 = ssub.s32 %s16, 1
      %s22 = ssub.s32 %s16, 2
      %s29 = sadd.s32 1, %s24
      %p30 = scmp.ge.s32.totalorder %s29, 1
      %s31 = scalar_select %p30, 0, %s29
      %s32 = sadd.s32 1, %s23
      %s33 = scalar_select %p30, %s32, %s23
      %p34 = scmp.ge.s32.totalorder %s33, 2
      %s35 = scalar_select %p34, 0, %s33
      %s36 = ssub.s32 %s23, %s35
      %s37 = ssub.s32 %s24, %s31
      %s38 = sor.u32 %s36, %s37
      %p39 = scmp.eq.s32.totalorder %s38, 0
      %s41 = sadd.s32 %s40, 1
      %s42 = scalar_select %p39, %s40, %s41
      %p45 = pneg %p39
      %p46 = scmp.eq.s32.totalorder %s16, 1
      %p47 = por %p45, %p46
      %p48 = scmp.ne.s32.totalorder %s40, %s43
      %p49 = scmp.eq.s32.totalorder %s16, 0
      %p50 = por %p48, %p49
      %p51 = scmp.ne.s32.totalorder %s40, %s43
      %p52 = scmp.eq.s32.totalorder %s21, 1
      %p53 = por %p51, %p52
      %p54 = scmp.ne.s32.totalorder %s43, %s44
      %p55 = scmp.eq.s32.totalorder %s21, 0
      %p56 = por %p54, %p55
      %p57 = scmp.ne.s32.totalorder %s43, %s44
      %p58 = scmp.eq.s32.totalorder %s22, 1
      %p59 = por %p57, %p58
      %p61 = scmp.ne.s32.totalorder %s44, %s60
      %p62 = scmp.eq.s32.totalorder %s22, 0
      %p63 = por %p61, %p62
      %s64 = ssub.s32 %s24, %s31
      %p65 = scmp.eq.s32.totalorder %s64, 0
      %s67 = sadd.s32 %s66, 1
      %s68 = scalar_select %p65, %s66, %s67
      %p71 = pneg %p65
      %p72 = scmp.eq.s32.totalorder %s16, 1
      %p73 = por %p71, %p72
      %p74 = scmp.ne.s32.totalorder %s66, %s69
      %p75 = scmp.eq.s32.totalorder %s16, 0
      %p76 = por %p74, %p75
      %p77 = scmp.ne.s32.totalorder %s66, %s69
      %p78 = scmp.eq.s32.totalorder %s21, 1
      %p79 = por %p77, %p78
      %p80 = scmp.ne.s32.totalorder %s69, %s70
      %p81 = scmp.eq.s32.totalorder %s21, 0
      %p82 = por %p80, %p81
      %p83 = scmp.ne.s32.totalorder %s69, %s70
      %p84 = scmp.eq.s32.totalorder %s22, 1
      %p85 = por %p83, %p84
      %p87 = scmp.ne.s32.totalorder %s70, %s86
      %p88 = scmp.eq.s32.totalorder %s22, 0
      %p89 = por %p87, %p88
      %s90 = ssub.s32 %s23, %s35
      %p91 = scmp.eq.s32.totalorder %s90, 0
      %s93 = sadd.s32 %s92, 1
      %s94 = scalar_select %p91, %s92, %s93
      %p97 = pneg %p91
      %p98 = scmp.eq.s32.totalorder %s16, 1
      %p99 = por %p97, %p98
      %p100 = scmp.ne.s32.totalorder %s92, %s95
      %p101 = scmp.eq.s32.totalorder %s16, 0
      %p102 = por %p100, %p101
      %p103 = scmp.ne.s32.totalorder %s92, %s95
      %p104 = scmp.eq.s32.totalorder %s21, 1
      %p105 = por %p103, %p104
      %p106 = scmp.ne.s32.totalorder %s95, %s96
      %p107 = scmp.eq.s32.totalorder %s21, 0
      %p108 = por %p106, %p107
      %p109 = scmp.ne.s32.totalorder %s95, %s96
      %p110 = scmp.eq.s32.totalorder %s22, 1
      %p111 = por %p109, %p110
      %p113 = scmp.ne.s32.totalorder %s96, %s112
      %p114 = scmp.eq.s32.totalorder %s22, 0
      %p115 = por %p113, %p114
      %s116 = ssub.s32 %s23, %s35
      %p117 = scmp.eq.s32.totalorder %s116, 0
      %s119 = sadd.s32 %s118, 1
      %s120 = scalar_select %p117, %s118, %s119
      %p123 = pneg %p117
      %p124 = scmp.eq.s32.totalorder %s16, 1
      %p125 = por %p123, %p124
      %p126 = scmp.ne.s32.totalorder %s118, %s121
      %p127 = scmp.eq.s32.totalorder %s16, 0
      %p128 = por %p126, %p127
      %p129 = scmp.ne.s32.totalorder %s118, %s121
      %p130 = scmp.eq.s32.totalorder %s21, 1
      %p131 = por %p129, %p130
      %p132 = scmp.ne.s32.totalorder %s121, %s122
      %p133 = scmp.eq.s32.totalorder %s21, 0
      %p134 = por %p132, %p133
      %p135 = scmp.ne.s32.totalorder %s121, %s122
      %p136 = scmp.eq.s32.totalorder %s22, 1
      %p137 = por %p135, %p136
      %p139 = scmp.ne.s32.totalorder %s122, %s138
      %p140 = scmp.eq.s32.totalorder %s22, 0
      %p141 = por %p139, %p140
      %s143 = sadd.s32 %s142, 1
      %p146 = scmp.eq.s32.totalorder %s16, 1
      %p147 = scmp.ne.s32.totalorder %s142, %s144
      %p148 = scmp.eq.s32.totalorder %s16, 0
      %p149 = por %p147, %p148
      %p150 = scmp.ne.s32.totalorder %s142, %s144
      %p151 = scmp.eq.s32.totalorder %s21, 1
      %p152 = por %p150, %p151
      %p153 = scmp.ne.s32.totalorder %s144, %s145
      %p154 = scmp.eq.s32.totalorder %s21, 0
      %p155 = por %p153, %p154
      %p156 = scmp.ne.s32.totalorder %s144, %s145
      %p157 = scmp.eq.s32.totalorder %s22, 1
      %p158 = por %p156, %p157
      %p160 = scmp.ne.s32.totalorder %s145, %s159
      %p161 = scmp.eq.s32.totalorder %s22, 0
      %p162 = por %p160, %p161
      %s164 = sadd.s32 %s163, 1
      %p167 = scmp.eq.s32.totalorder %s16, 1
      %p168 = scmp.ne.s32.totalorder %s163, %s165
      %p169 = scmp.eq.s32.totalorder %s16, 0
      %p170 = por %p168, %p169
      %p171 = scmp.ne.s32.totalorder %s163, %s165
      %p172 = scmp.eq.s32.totalorder %s21, 1
      %p173 = por %p171, %p172
      %p174 = scmp.ne.s32.totalorder %s165, %s166
      %p175 = scmp.eq.s32.totalorder %s21, 0
      %p176 = por %p174, %p175
      %p177 = scmp.ne.s32.totalorder %s165, %s166
      %p178 = scmp.eq.s32.totalorder %s22, 1
      %p179 = por %p177, %p178
      %p181 = scmp.ne.s32.totalorder %s166, %s180
      %p182 = scmp.eq.s32.totalorder %s22, 0
      %p183 = por %p181, %p182
      %s185 = sadd.s32 %s184, 1
      %p188 = scmp.eq.s32.totalorder %s16, 1
      %p189 = scmp.ne.s32.totalorder %s184, %s186
      %p190 = scmp.eq.s32.totalorder %s16, 0
      %p191 = por %p189, %p190
      %p192 = scmp.ne.s32.totalorder %s184, %s186
      %p193 = scmp.eq.s32.totalorder %s21, 1
      %p194 = por %p192, %p193
      %p195 = scmp.ne.s32.totalorder %s186, %s187
      %p196 = scmp.eq.s32.totalorder %s21, 0
      %p197 = por %p195, %p196
      %p198 = scmp.ne.s32.totalorder %s186, %s187
      %p199 = scmp.eq.s32.totalorder %s22, 1
      %p200 = por %p198, %p199
      %p202 = scmp.ne.s32.totalorder %s187, %s201
      %p203 = scmp.eq.s32.totalorder %s22, 0
      %p204 = por %p202, %p203
      %s205 = ssub.s32 %s23, %s35
      %p206 = scmp.eq.s32.totalorder %s205, 0
      %s208 = sadd.s32 %s207, 1
      %s209 = scalar_select %p206, %s207, %s208
      %p212 = pneg %p206
      %p213 = scmp.eq.s32.totalorder %s16, 1
      %p214 = por %p212, %p213
      %p215 = scmp.ne.s32.totalorder %s207, %s210
      %p216 = scmp.eq.s32.totalorder %s16, 0
      %p217 = por %p215, %p216
      %p218 = scmp.ne.s32.totalorder %s207, %s210
      %p219 = scmp.eq.s32.totalorder %s21, 1
      %p220 = por %p218, %p219
      %p221 = scmp.ne.s32.totalorder %s210, %s211
      %p222 = scmp.eq.s32.totalorder %s21, 0
      %p223 = por %p221, %p222
      %p224 = scmp.ne.s32.totalorder %s210, %s211
      %p225 = scmp.eq.s32.totalorder %s22, 1
      %p226 = por %p224, %p225
      %p228 = scmp.ne.s32.totalorder %s211, %s227
      %p229 = scmp.eq.s32.totalorder %s22, 0
      %p230 = por %p228, %p229
      %p231 = scmp.le.s32.totalorder 1, %s16
      %p232 = scmp.lt.s32.totalorder %s16, 3
      %p233 = pnand %p231, %p232
      %p234 = pneg %p233
      // Predicated region
      $region9: #{tpu_custom_call.1} parent=5 // pred_check
        _
      $region10: #{tpu_custom_call.1} parent=5 // pred_check_branch
        %236 = sbr.rel (%p233) target = $region12
      $region11: #{tpu_custom_call.1} parent=5 // pred_region
        %s237 = ssub.s32 %s16, 1
        // Predicated region
        $region13: #{tpu_custom_call.1} parent=11 // pred_check
          %p238 = pneg %p82
        $region14: #{tpu_custom_call.1} parent=11 // pred_check_branch
          %240 = sbr.rel (%p238) target = $region16
        $region15: #{tpu_custom_call.1} parent=11 // pred_region
          %s241 = smul.u32 80, %s26
          %p242 = scmp.lt.s32.totalorder %s241, 79
          %s243 = scalar_select %p242, %s241, 79
          %s244 = smul.addr %s243, 4
          %s245 = scalar_lea.vmem %s1, %s244
          %s246 = smul.u32 80, %s26
        $region16: #{tpu_custom_call.1} parent=11 // pred_fallthru
          _
        // Predicated region
        $region17: #{tpu_custom_call.1} parent=11 // pred_check
          %p247 = pneg %p155
        $region18: #{tpu_custom_call.1} parent=11 // pred_check_branch
          %249 = sbr.rel (%p247) target = $region20
        $region19: #{tpu_custom_call.1} parent=11 // pred_region
          _
        $region20: #{tpu_custom_call.1} parent=11 // pred_fallthru
          _
        // Predicated region
        $region21: #{tpu_custom_call.1} parent=11 // pred_check
          %p250 = pneg %p176
        $region22: #{tpu_custom_call.1} parent=11 // pred_check_branch
          %252 = sbr.rel (%p250) target = $region24
        $region23: #{tpu_custom_call.1} parent=11 // pred_region
          _
        $region24: #{tpu_custom_call.1} parent=11 // pred_fallthru
          _
        // Predicated region
        $region25: #{tpu_custom_call.1} parent=11 // pred_check
          %p253 = pneg %p197
        $region26: #{tpu_custom_call.1} parent=11 // pred_check_branch
          %255 = sbr.rel (%p253) target = $region28
        $region27: #{tpu_custom_call.1} parent=11 // pred_region
          _
        $region28: #{tpu_custom_call.1} parent=11 // pred_fallthru
          _
      $region12: #{tpu_custom_call.1} parent=5 // pred_fallthru
        _
      %p256 = scmp.lt.s32.totalorder %s16, 2
      // Predicated region
      $region29: #{tpu_custom_call.1} parent=5 // pred_check
        %p257 = pneg %p256
      $region30: #{tpu_custom_call.1} parent=5 // pred_check_branch
        %259 = sbr.rel (%p257) target = $region32
      $region31: #{tpu_custom_call.1} parent=5 // pred_region
        // Predicated region
        $region33: #{tpu_custom_call.1} parent=31 // pred_check
          %p260 = pneg %p50
        $region34: #{tpu_custom_call.1} parent=31 // pred_check_branch
          %262 = sbr.rel (%p260) target = $region36
        $region35: #{tpu_custom_call.1} parent=31 // pred_region
          %s263 = smul.u32 5, %s23
          %s264 = smul.u32 5, %s24
          %p265 = scmp.lt.s32.totalorder %s263, 9
          %s266 = scalar_select %p265, %s263, 9
          %p267 = scmp.lt.s32.totalorder %s264, 4
          %s268 = scalar_select %p267, %s264, 4
          %s269 = smul.addr %s266, 5
          %s270 = sadd.s32 %s268, %s269
          %s271 = smul.addr %s270, 8
          %s272 = scalar_lea.vmem %s0, %s271
          %s273 = smul.u32 5, %s23
          %s274 = smul.u32 5, %s24
        $region36: #{tpu_custom_call.1} parent=31 // pred_fallthru
          _
        // Predicated region
        $region37: #{tpu_custom_call.1} parent=31 // pred_check
          %p275 = pneg %p102
        $region38: #{tpu_custom_call.1} parent=31 // pred_check_branch
          %277 = sbr.rel (%p275) target = $region40
        $region39: #{tpu_custom_call.1} parent=31 // pred_region
          %s278 = smul.u32 20, %s23
          %p279 = scmp.lt.s32.totalorder %s278, 39
          %s280 = scalar_select %p279, %s278, 39
          %s281 = smul.addr %s280, 4
          %s282 = scalar_lea.vmem %s2, %s281
          %s283 = smul.u32 20, %s23
        $region40: #{tpu_custom_call.1} parent=31 // pred_fallthru
          _
        // Predicated region
        $region41: #{tpu_custom_call.1} parent=31 // pred_check
          %p284 = pneg %p128
        $region42: #{tpu_custom_call.1} parent=31 // pred_check_branch
          %286 = sbr.rel (%p284) target = $region44
        $region43: #{tpu_custom_call.1} parent=31 // pred_region
          %s287 = smul.u32 20, %s23
          %p288 = scmp.lt.s32.totalorder %s287, 39
          %s289 = scalar_select %p288, %s287, 39
          %s290 = smul.addr %s289, 8
          %s291 = scalar_lea.vmem %s3, %s290
          %s292 = smul.u32 20, %s23
        $region44: #{tpu_custom_call.1} parent=31 // pred_fallthru
          _
      $region32: #{tpu_custom_call.1} parent=5 // pred_fallthru
        _
      %p293 = scmp.le.s32.totalorder 1, %s16
      %p294 = scmp.lt.s32.totalorder %s16, 3
      %p295 = pnand %p293, %p294
      %p296 = pneg %p295
      // Predicated region
      $region45: #{tpu_custom_call.1} parent=5 // pred_check
        _
      $region46: #{tpu_custom_call.1} parent=5 // pred_check_branch
        %298 = sbr.rel (%p295) target = $region48
      $region47: #{tpu_custom_call.1} parent=5 // pred_region
        %s299 = ssub.s32 %s16, 1
        %s300 = smul.u32 5, %s25
        %s301 = smul.u32 5, %s26
        %p302 = scmp.lt.s32.totalorder %s300, 9
        %s303 = scalar_select %p302, %s300, 9
        %p304 = scmp.lt.s32.totalorder %s301, 4
        %s305 = scalar_select %p304, %s301, 4
        %s306 = smul.addr %s303, 5
        %s307 = sadd.s32 %s305, %s306
        %s308 = smul.addr %s307, 8
        %s309 = scalar_lea.vmem %s0, %s308
        %p310 = pneg %p56
        %p311 = pneg %p53
        %s312 = smul.u32 80, %s26
        %p313 = scmp.lt.s32.totalorder %s312, 79
        %s314 = scalar_select %p313, %s312, 79
        %s315 = smul.addr %s314, 4
        %s316 = scalar_lea.vmem %s1, %s315
        %p317 = pneg %p82
        %p318 = pneg %p79
        %s319 = smul.u32 20, %s25
        %p320 = scmp.lt.s32.totalorder %s319, 39
        %s321 = scalar_select %p320, %s319, 39
        %s322 = smul.addr %s321, 4
        %s323 = scalar_lea.vmem %s2, %s322
        %p324 = pneg %p108
        %p325 = pneg %p105
        %s326 = smul.u32 20, %s25
        %p327 = scmp.lt.s32.totalorder %s326, 39
        %s328 = scalar_select %p327, %s326, 39
        %s329 = smul.addr %s328, 8
        %s330 = scalar_lea.vmem %s3, %s329
        %p331 = pneg %p134
        %p332 = pneg %p131
        %p333 = pneg %p155
        %p334 = pneg %p152
        %p335 = pneg %p176
        %p336 = pneg %p173
        %p337 = pneg %p197
        %p338 = pneg %p194
        %p339 = pneg %p223
        %p340 = pneg %p220
        %s341 = sand.u32 %s210, 1
        %s342 = scalar_lea.sflag [#allocation4], %s341
        %s343 = sand.u32 %s210, 1
        %s344 = smul.addr %s343, 80
        %s345 = scalar_lea.vmem [#allocation3], %s344
        %s346 = smul.u32 5, %s25
        %s347 = smul.u32 5, %s26
        %p348 = scmp.lt.s32.totalorder %s346, 9
        %s349 = scalar_select %p348, %s346, 9
        %p350 = scmp.lt.s32.totalorder %s347, 4
        %s351 = scalar_select %p350, %s347, 4
        %s352 = smul.addr %s349, 5
        %s353 = sadd.s32 %s351, %s352
        %s354 = smul.addr %s353, 8
        %s355 = scalar_lea.vmem %s0, %s354
        %s356 = smul.u32 5, %s25
        %s357 = smul.u32 5, %s26
        %s358 = smul.u32 80, %s26
        %p359 = scmp.lt.s32.totalorder %s358, 79
        %s360 = scalar_select %p359, %s358, 79
        %s361 = smul.addr %s360, 4
        %s362 = scalar_lea.vmem %s1, %s361
        %s363 = smul.u32 80, %s26
        %s364 = smul.u32 20, %s25
        %p365 = scmp.lt.s32.totalorder %s364, 39
        %s366 = scalar_select %p365, %s364, 39
        %s367 = smul.addr %s366, 4
        %s368 = scalar_lea.vmem %s2, %s367
        %s369 = smul.u32 20, %s25
        %s370 = smul.u32 20, %s25
        %p371 = scmp.lt.s32.totalorder %s370, 39
        %s372 = scalar_select %p371, %s370, 39
        %s373 = smul.addr %s372, 8
        %s374 = scalar_lea.vmem %s3, %s373
        %s375 = smul.u32 20, %s25
        %s376 = smul.u32 20, %s25
        %p378 = scmp.eq.s32.totalorder %s26, 0
        // Predicated region
        $region49: #{tpu_custom_call.1} parent=47 // pred_check
          %p379 = pneg %p378
        $region50: #{tpu_custom_call.1} parent=47 // pred_check_branch
          %381 = sbr.rel (%p379) target = $region52
        $region51: #{tpu_custom_call.1} parent=47 // pred_region
          %vm382 = vcmask 523264
          %383 = vst.msk [vmem:[#allocation2] sm:$0xff] %vm382, 0.0
          %384 = vst.msk [vmem:[#allocation2 + $0x8] sm:$0xff] %vm382, 0.0
          %385 = vst.msk [vmem:[#allocation2 + $0x10] sm:$0xff] %vm382, 0.0
          %386 = vst.msk [vmem:[#allocation2 + $0x18] sm:$0xff] %vm382, 0.0
          %387 = vst.msk [vmem:[#allocation2 + $0x20] sm:$0xff] %vm382, 0.0
          %388 = vst.msk [vmem:[#allocation2 + $0x28] sm:$0xff] %vm382, 0.0
          %389 = vst.msk [vmem:[#allocation2 + $0x30] sm:$0xff] %vm382, 0.0
          %390 = vst.msk [vmem:[#allocation2 + $0x38] sm:$0xff] %vm382, 0.0
          %391 = vst.msk [vmem:[#allocation2 + $0x40] sm:$0xff] %vm382, 0.0
          %392 = vst.msk [vmem:[#allocation2 + $0x48] sm:$0xff] %vm382, 0.0
          %393 = vst.msk [vmem:[#allocation2 + $0x50] sm:$0xff] %vm382, 0.0
          %394 = vst.msk [vmem:[#allocation2 + $0x58] sm:$0xff] %vm382, 0.0
          %395 = vst.msk [vmem:[#allocation2 + $0x60] sm:$0xff] %vm382, 0.0
          %396 = vst.msk [vmem:[#allocation2 + $0x68] sm:$0xff] %vm382, 0.0
          %397 = vst.msk [vmem:[#allocation2 + $0x70] sm:$0xff] %vm382, 0.0
          %398 = vst.msk [vmem:[#allocation2 + $0x78] sm:$0xff] %vm382, 0.0
          %399 = vst.msk [vmem:[#allocation2 + $0x80] sm:$0xff] %vm382, 0.0
          %400 = vst.msk [vmem:[#allocation2 + $0x88] sm:$0xff] %vm382, 0.0
          %401 = vst.msk [vmem:[#allocation2 + $0x90] sm:$0xff] %vm382, 0.0
          %402 = vst.msk [vmem:[#allocation2 + $0x98] sm:$0xff] %vm382, 0.0
        $region52: #{tpu_custom_call.1} parent=47 // pred_fallthru
          _
        %v403 = vld [vmem:[%s355] sm:$0xff]
        %v404 = vld [vmem:[%s355 + $0x8] sm:$0xff]
        %v405 = vld [vmem:[%s355 + $0x10] sm:$0xff]
        %v406 = vld [vmem:[%s355 + $0x18] sm:$0xff]
        %v407 = vld [vmem:[%s355 + $0x20] sm:$0xff]
        %v408 = vld [vmem:[%s355 + $0x28] sm:$0xff]
        %v409 = vld [vmem:[%s355 + $0x30] sm:$0xff]
        %v410 = vld [vmem:[%s355 + $0x38] sm:$0xff]
        %v411 = vld [vmem:[%s355 + $0x40] sm:$0xff]
        %v412 = vld [vmem:[%s355 + $0x48] sm:$0xff]
        %v413 = vld [vmem:[%s355 + $0x50] sm:$0xff]
        %v414 = vld [vmem:[%s355 + $0x58] sm:$0xff]
        %v415 = vld [vmem:[%s355 + $0x60] sm:$0xff]
        %v416 = vld [vmem:[%s355 + $0x68] sm:$0xff]
        %v417 = vld [vmem:[%s355 + $0x70] sm:$0xff]
        %v418 = vld [vmem:[%s355 + $0x78] sm:$0xff]
        %v419 = vld [vmem:[%s355 + $0x80] sm:$0xff]
        %v420 = vld [vmem:[%s355 + $0x88] sm:$0xff]
        %v421 = vld [vmem:[%s355 + $0x90] sm:$0xff]
        %v422 = vld [vmem:[%s355 + $0x98] sm:$0xff]
        %v423 = vld [vmem:[%s355 + $0xa0] sm:$0xff]
        %v424 = vld [vmem:[%s355 + $0xa8] sm:$0xff]
        %v425 = vld [vmem:[%s355 + $0xb0] sm:$0xff]
        %v426 = vld [vmem:[%s355 + $0xb8] sm:$0xff]
        %v427 = vld [vmem:[%s355 + $0xc0] sm:$0xff]
        %v428 = vunpack.c.0.s8 %v403
        %v429 = vunpack.c.0.s8 %v404
        %v430 = vunpack.c.0.s8 %v405
        %v431 = vunpack.c.0.s8 %v406
        %v432 = vunpack.c.0.s8 %v407
        %v433 = vunpack.c.1.s8 %v403
        %v434 = vunpack.c.1.s8 %v404
        %v435 = vunpack.c.1.s8 %v405
        %v436 = vunpack.c.1.s8 %v406
        %v437 = vunpack.c.1.s8 %v407
        %v438 = vunpack.c.2.s8 %v403
        %v439 = vunpack.c.2.s8 %v404
        %v440 = vunpack.c.2.s8 %v405
        %v441 = vunpack.c.2.s8 %v406
        %v442 = vunpack.c.2.s8 %v407
        %v443 = vunpack.c.3.s8 %v403
        %v444 = vunpack.c.3.s8 %v404
        %v445 = vunpack.c.3.s8 %v405
        %v446 = vunpack.c.3.s8 %v406
        %v447 = vunpack.c.3.s8 %v407
        %v448 = vunpack.c.0.s8 %v408
        %v449 = vunpack.c.0.s8 %v409
        %v450 = vunpack.c.0.s8 %v410
        %v451 = vunpack.c.0.s8 %v411
        %v452 = vunpack.c.0.s8 %v412
        %v453 = vunpack.c.1.s8 %v408
        %v454 = vunpack.c.1.s8 %v409
        %v455 = vunpack.c.1.s8 %v410
        %v456 = vunpack.c.1.s8 %v411
        %v457 = vunpack.c.1.s8 %v412
        %v458 = vunpack.c.2.s8 %v408
        %v459 = vunpack.c.2.s8 %v409
        %v460 = vunpack.c.2.s8 %v410
        %v461 = vunpack.c.2.s8 %v411
        %v462 = vunpack.c.2.s8 %v412
        %v463 = vunpack.c.3.s8 %v408
        %v464 = vunpack.c.3.s8 %v409
        %v465 = vunpack.c.3.s8 %v410
        %v466 = vunpack.c.3.s8 %v411
        %v467 = vunpack.c.3.s8 %v412
        %v468 = vunpack.c.0.s8 %v413
        %v469 = vunpack.c.0.s8 %v414
        %v470 = vunpack.c.0.s8 %v415
        %v471 = vunpack.c.0.s8 %v416
        %v472 = vunpack.c.0.s8 %v417
        %v473 = vunpack.c.1.s8 %v413
        %v474 = vunpack.c.1.s8 %v414
        %v475 = vunpack.c.1.s8 %v415
        %v476 = vunpack.c.1.s8 %v416
        %v477 = vunpack.c.1.s8 %v417
        %v478 = vunpack.c.2.s8 %v413
        %v479 = vunpack.c.2.s8 %v414
        %v480 = vunpack.c.2.s8 %v415
        %v481 = vunpack.c.2.s8 %v416
        %v482 = vunpack.c.2.s8 %v417
        %v483 = vunpack.c.3.s8 %v413
        %v484 = vunpack.c.3.s8 %v414
        %v485 = vunpack.c.3.s8 %v415
        %v486 = vunpack.c.3.s8 %v416
        %v487 = vunpack.c.3.s8 %v417
        %v488 = vunpack.c.0.s8 %v418
        %v489 = vunpack.c.0.s8 %v419
        %v490 = vunpack.c.0.s8 %v420
        %v491 = vunpack.c.0.s8 %v421
        %v492 = vunpack.c.0.s8 %v422
        %v493 = vunpack.c.1.s8 %v418
        %v494 = vunpack.c.1.s8 %v419
        %v495 = vunpack.c.1.s8 %v420
        %v496 = vunpack.c.1.s8 %v421
        %v497 = vunpack.c.1.s8 %v422
        %v498 = vunpack.c.2.s8 %v418
        %v499 = vunpack.c.2.s8 %v419
        %v500 = vunpack.c.2.s8 %v420
        %v501 = vunpack.c.2.s8 %v421
        %v502 = vunpack.c.2.s8 %v422
        %v503 = vunpack.c.3.s8 %v418
        %v504 = vunpack.c.3.s8 %v419
        %v505 = vunpack.c.3.s8 %v420
        %v506 = vunpack.c.3.s8 %v421
        %v507 = vunpack.c.3.s8 %v422
        %v508 = vunpack.c.0.s8 %v423
        %v509 = vunpack.c.0.s8 %v424
        %v510 = vunpack.c.0.s8 %v425
        %v511 = vunpack.c.0.s8 %v426
        %v512 = vunpack.c.0.s8 %v427
        %v513 = vunpack.c.1.s8 %v423
        %v514 = vunpack.c.1.s8 %v424
        %v515 = vunpack.c.1.s8 %v425
        %v516 = vunpack.c.1.s8 %v426
        %v517 = vunpack.c.1.s8 %v427
        %v518 = vunpack.c.2.s8 %v423
        %v519 = vunpack.c.2.s8 %v424
        %v520 = vunpack.c.2.s8 %v425
        %v521 = vunpack.c.2.s8 %v426
        %v522 = vunpack.c.2.s8 %v427
        %v523 = vunpack.c.3.s8 %v423
        %v524 = vunpack.c.3.s8 %v424
        %v525 = vunpack.c.3.s8 %v425
        %v526 = vunpack.c.3.s8 %v426
        %v527 = vunpack.c.3.s8 %v427
        %v528 = vcvt.s32.f32 %v428
        %v529 = vcvt.s32.f32 %v429
        %v530 = vcvt.s32.f32 %v430
        %v531 = vcvt.s32.f32 %v431
        %v532 = vcvt.s32.f32 %v432
        %v533 = vcvt.s32.f32 %v433
        %v534 = vcvt.s32.f32 %v434
        %v535 = vcvt.s32.f32 %v435
        %v536 = vcvt.s32.f32 %v436
        %v537 = vcvt.s32.f32 %v437
        %v538 = vcvt.s32.f32 %v438
        %v539 = vcvt.s32.f32 %v439
        %v540 = vcvt.s32.f32 %v440
        %v541 = vcvt.s32.f32 %v441
        %v542 = vcvt.s32.f32 %v442
        %v543 = vcvt.s32.f32 %v443
        %v544 = vcvt.s32.f32 %v444
        %v545 = vcvt.s32.f32 %v445
        %v546 = vcvt.s32.f32 %v446
        %v547 = vcvt.s32.f32 %v447
        %v548 = vcvt.s32.f32 %v448
        %v549 = vcvt.s32.f32 %v449
        %v550 = vcvt.s32.f32 %v450
        %v551 = vcvt.s32.f32 %v451
        %v552 = vcvt.s32.f32 %v452
        %v553 = vcvt.s32.f32 %v453
        %v554 = vcvt.s32.f32 %v454
        %v555 = vcvt.s32.f32 %v455
        %v556 = vcvt.s32.f32 %v456
        %v557 = vcvt.s32.f32 %v457
        %v558 = vcvt.s32.f32 %v458
        %v559 = vcvt.s32.f32 %v459
        %v560 = vcvt.s32.f32 %v460
        %v561 = vcvt.s32.f32 %v461
        %v562 = vcvt.s32.f32 %v462
        %v563 = vcvt.s32.f32 %v463
        %v564 = vcvt.s32.f32 %v464
        %v565 = vcvt.s32.f32 %v465
        %v566 = vcvt.s32.f32 %v466
        %v567 = vcvt.s32.f32 %v467
        %v568 = vcvt.s32.f32 %v468
        %v569 = vcvt.s32.f32 %v469
        %v570 = vcvt.s32.f32 %v470
        %v571 = vcvt.s32.f32 %v471
        %v572 = vcvt.s32.f32 %v472
        %v573 = vcvt.s32.f32 %v473
        %v574 = vcvt.s32.f32 %v474
        %v575 = vcvt.s32.f32 %v475
        %v576 = vcvt.s32.f32 %v476
        %v577 = vcvt.s32.f32 %v477
        %v578 = vcvt.s32.f32 %v478
        %v579 = vcvt.s32.f32 %v479
        %v580 = vcvt.s32.f32 %v480
        %v581 = vcvt.s32.f32 %v481
        %v582 = vcvt.s32.f32 %v482
        %v583 = vcvt.s32.f32 %v483
        %v584 = vcvt.s32.f32 %v484
        %v585 = vcvt.s32.f32 %v485
        %v586 = vcvt.s32.f32 %v486
        %v587 = vcvt.s32.f32 %v487
        %v588 = vcvt.s32.f32 %v488
        %v589 = vcvt.s32.f32 %v489
        %v590 = vcvt.s32.f32 %v490
        %v591 = vcvt.s32.f32 %v491
        %v592 = vcvt.s32.f32 %v492
        %v593 = vcvt.s32.f32 %v493
        %v594 = vcvt.s32.f32 %v494
        %v595 = vcvt.s32.f32 %v495
        %v596 = vcvt.s32.f32 %v496
        %v597 = vcvt.s32.f32 %v497
        %v598 = vcvt.s32.f32 %v498
        %v599 = vcvt.s32.f32 %v499
        %v600 = vcvt.s32.f32 %v500
        %v601 = vcvt.s32.f32 %v501
        %v602 = vcvt.s32.f32 %v502
        %v603 = vcvt.s32.f32 %v503
        %v604 = vcvt.s32.f32 %v504
        %v605 = vcvt.s32.f32 %v505
        %v606 = vcvt.s32.f32 %v506
        %v607 = vcvt.s32.f32 %v507
        %v608 = vcvt.s32.f32 %v508
        %v609 = vcvt.s32.f32 %v509
        %v610 = vcvt.s32.f32 %v510
        %v611 = vcvt.s32.f32 %v511
        %v612 = vcvt.s32.f32 %v512
        %v613 = vcvt.s32.f32 %v513
        %v614 = vcvt.s32.f32 %v514
        %v615 = vcvt.s32.f32 %v515
        %v616 = vcvt.s32.f32 %v516
        %v617 = vcvt.s32.f32 %v517
        %v618 = vcvt.s32.f32 %v518
        %v619 = vcvt.s32.f32 %v519
        %v620 = vcvt.s32.f32 %v520
        %v621 = vcvt.s32.f32 %v521
        %v622 = vcvt.s32.f32 %v522
        %v623 = vcvt.s32.f32 %v523
        %v624 = vcvt.s32.f32 %v524
        %v625 = vcvt.s32.f32 %v525
        %v626 = vcvt.s32.f32 %v526
        %v627 = vcvt.s32.f32 %v527
        %v628 = vpack.c.bf16 %v533, %v528
        %v629 = vpack.c.bf16 %v534, %v529
        %v630 = vpack.c.bf16 %v535, %v530
        %v631 = vpack.c.bf16 %v536, %v531
        %v632 = vpack.c.bf16 %v537, %v532
        %v633 = vpack.c.bf16 %v543, %v538
        %v634 = vpack.c.bf16 %v544, %v539
        %v635 = vpack.c.bf16 %v545, %v540
        %v636 = vpack.c.bf16 %v546, %v541
        %v637 = vpack.c.bf16 %v547, %v542
        %v638 = vpack.c.bf16 %v553, %v548
        %v639 = vpack.c.bf16 %v554, %v549
        %v640 = vpack.c.bf16 %v555, %v550
        %v641 = vpack.c.bf16 %v556, %v551
        %v642 = vpack.c.bf16 %v557, %v552
        %v643 = vpack.c.bf16 %v563, %v558
        %v644 = vpack.c.bf16 %v564, %v559
        %v645 = vpack.c.bf16 %v565, %v560
        %v646 = vpack.c.bf16 %v566, %v561
        %v647 = vpack.c.bf16 %v567, %v562
        %v648 = vpack.c.bf16 %v573, %v568
        %v649 = vpack.c.bf16 %v574, %v569
        %v650 = vpack.c.bf16 %v575, %v570
        %v651 = vpack.c.bf16 %v576, %v571
        %v652 = vpack.c.bf16 %v577, %v572
        %v653 = vpack.c.bf16 %v583, %v578
        %v654 = vpack.c.bf16 %v584, %v579
        %v655 = vpack.c.bf16 %v585, %v580
        %v656 = vpack.c.bf16 %v586, %v581
        %v657 = vpack.c.bf16 %v587, %v582
        %v658 = vpack.c.bf16 %v593, %v588
        %v659 = vpack.c.bf16 %v594, %v589
        %v660 = vpack.c.bf16 %v595, %v590
        %v661 = vpack.c.bf16 %v596, %v591
        %v662 = vpack.c.bf16 %v597, %v592
        %v663 = vpack.c.bf16 %v603, %v598
        %v664 = vpack.c.bf16 %v604, %v599
        %v665 = vpack.c.bf16 %v605, %v600
        %v666 = vpack.c.bf16 %v606, %v601
        %v667 = vpack.c.bf16 %v607, %v602
        %v668 = vpack.c.bf16 %v613, %v608
        %v669 = vpack.c.bf16 %v614, %v609
        %v670 = vpack.c.bf16 %v615, %v610
        %v671 = vpack.c.bf16 %v616, %v611
        %v672 = vpack.c.bf16 %v617, %v612
        %v673 = vpack.c.bf16 %v623, %v618
        %v674 = vpack.c.bf16 %v624, %v619
        %v675 = vpack.c.bf16 %v625, %v620
        %v676 = vpack.c.bf16 %v626, %v621
        %v677 = vpack.c.bf16 %v627, %v622
        %v678 = vld [vmem:[#allocation2] sm:$0xff]
        %v679 = vld [vmem:[#allocation2 + $0x8] sm:$0xff]
        %v680 = vld [vmem:[#allocation2 + $0x10] sm:$0xff]
        %v681 = vld [vmem:[#allocation2 + $0x18] sm:$0xff]
        %v682 = vld [vmem:[#allocation2 + $0x20] sm:$0xff]
        %v683 = vld [vmem:[#allocation2 + $0x28] sm:$0xff]
        %v684 = vld [vmem:[#allocation2 + $0x30] sm:$0xff]
        %v685 = vld [vmem:[#allocation2 + $0x38] sm:$0xff]
        %v686 = vld [vmem:[#allocation2 + $0x40] sm:$0xff]
        %v687 = vld [vmem:[#allocation2 + $0x48] sm:$0xff]
        %v688 = vld [vmem:[#allocation2 + $0x50] sm:$0xff]
        %v689 = vld [vmem:[#allocation2 + $0x58] sm:$0xff]
        %v690 = vld [vmem:[#allocation2 + $0x60] sm:$0xff]
        %v691 = vld [vmem:[#allocation2 + $0x68] sm:$0xff]
        %v692 = vld [vmem:[#allocation2 + $0x70] sm:$0xff]
        %v693 = vld [vmem:[#allocation2 + $0x78] sm:$0xff]
        %v694 = vld [vmem:[#allocation2 + $0x80] sm:$0xff]
        %v695 = vld [vmem:[#allocation2 + $0x88] sm:$0xff]
        %v696 = vld [vmem:[#allocation2 + $0x90] sm:$0xff]
        %v697 = vld [vmem:[#allocation2 + $0x98] sm:$0xff]
        %v698 = vld [vmem:[%s362] sm:$0xf]
        %v699 = vld [vmem:[%s362 + $0x4] sm:$0xf]
        %v700 = vld [vmem:[%s362 + $0x8] sm:$0xf]
        %v701 = vld [vmem:[%s362 + $0xc] sm:$0xf]
        %v702 = vld [vmem:[%s362 + $0x10] sm:$0xf]
        %v703 = vld [vmem:[%s362 + $0x14] sm:$0xf]
        %v704 = vld [vmem:[%s362 + $0x18] sm:$0xf]
        %v705 = vld [vmem:[%s362 + $0x1c] sm:$0xf]
        %v706 = vld [vmem:[%s362 + $0x20] sm:$0xf]
        %v707 = vld [vmem:[%s362 + $0x24] sm:$0xf]
        %v708 = vld [vmem:[%s362 + $0x28] sm:$0xf]
        %v709 = vld [vmem:[%s362 + $0x2c] sm:$0xf]
        %v710 = vld [vmem:[%s362 + $0x30] sm:$0xf]
        %v711 = vld [vmem:[%s362 + $0x34] sm:$0xf]
        %v712 = vld [vmem:[%s362 + $0x38] sm:$0xf]
        %v713 = vld [vmem:[%s362 + $0x3c] sm:$0xf]
        %v714 = vld [vmem:[%s362 + $0x40] sm:$0xf]
        %v715 = vld [vmem:[%s362 + $0x44] sm:$0xf]
        %v716 = vld [vmem:[%s362 + $0x48] sm:$0xf]
        %v717 = vld [vmem:[%s362 + $0x4c] sm:$0xf]
        %v718 = vld [vmem:[%s362 + $0x50] sm:$0xf]
        %v719 = vld [vmem:[%s362 + $0x54] sm:$0xf]
        %v720 = vld [vmem:[%s362 + $0x58] sm:$0xf]
        %v721 = vld [vmem:[%s362 + $0x5c] sm:$0xf]
        %v722 = vld [vmem:[%s362 + $0x60] sm:$0xf]
        %v723 = vld [vmem:[%s362 + $0x64] sm:$0xf]
        %v724 = vld [vmem:[%s362 + $0x68] sm:$0xf]
        %v725 = vld [vmem:[%s362 + $0x6c] sm:$0xf]
        %v726 = vld [vmem:[%s362 + $0x70] sm:$0xf]
        %v727 = vld [vmem:[%s362 + $0x74] sm:$0xf]
        %v728 = vld [vmem:[%s362 + $0x78] sm:$0xf]
        %v729 = vld [vmem:[%s362 + $0x7c] sm:$0xf]
        %v730 = vld [vmem:[%s362 + $0x80] sm:$0xf]
        %v731 = vld [vmem:[%s362 + $0x84] sm:$0xf]
        %v732 = vld [vmem:[%s362 + $0x88] sm:$0xf]
        %v733 = vld [vmem:[%s362 + $0x8c] sm:$0xf]
        %v734 = vld [vmem:[%s362 + $0x90] sm:$0xf]
        %v735 = vld [vmem:[%s362 + $0x94] sm:$0xf]
        %v736 = vld [vmem:[%s362 + $0x98] sm:$0xf]
        %v737 = vld [vmem:[%s362 + $0x9c] sm:$0xf]
        %v738 = vld [vmem:[%s362 + $0xa0] sm:$0xf]
        %v739 = vld [vmem:[%s362 + $0xa4] sm:$0xf]
        %v740 = vld [vmem:[%s362 + $0xa8] sm:$0xf]
        %v741 = vld [vmem:[%s362 + $0xac] sm:$0xf]
        %v742 = vld [vmem:[%s362 + $0xb0] sm:$0xf]
        %v743 = vld [vmem:[%s362 + $0xb4] sm:$0xf]
        %v744 = vld [vmem:[%s362 + $0xb8] sm:$0xf]
        %v745 = vld [vmem:[%s362 + $0xbc] sm:$0xf]
        %v746 = vld [vmem:[%s362 + $0xc0] sm:$0xf]
        %v747 = vld [vmem:[%s362 + $0xc4] sm:$0xf]
        %v748 = vld [vmem:[%s362 + $0xc8] sm:$0xf]
        %v749 = vld [vmem:[%s362 + $0xcc] sm:$0xf]
        %v750 = vld [vmem:[%s362 + $0xd0] sm:$0xf]
        %v751 = vld [vmem:[%s362 + $0xd4] sm:$0xf]
        %v752 = vld [vmem:[%s362 + $0xd8] sm:$0xf]
        %v753 = vld [vmem:[%s362 + $0xdc] sm:$0xf]
        %v754 = vld [vmem:[%s362 + $0xe0] sm:$0xf]
        %v755 = vld [vmem:[%s362 + $0xe4] sm:$0xf]
        %v756 = vld [vmem:[%s362 + $0xe8] sm:$0xf]
        %v757 = vld [vmem:[%s362 + $0xec] sm:$0xf]
        %v758 = vld [vmem:[%s362 + $0xf0] sm:$0xf]
        %v759 = vld [vmem:[%s362 + $0xf4] sm:$0xf]
        %v760 = vld [vmem:[%s362 + $0xf8] sm:$0xf]
        %v761 = vld [vmem:[%s362 + $0xfc] sm:$0xf]
        %v762 = vld [vmem:[%s362 + $0x100] sm:$0xf]
        %v763 = vld [vmem:[%s362 + $0x104] sm:$0xf]
        %v764 = vld [vmem:[%s362 + $0x108] sm:$0xf]
        %v765 = vld [vmem:[%s362 + $0x10c] sm:$0xf]
        %v766 = vld [vmem:[%s362 + $0x110] sm:$0xf]
        %v767 = vld [vmem:[%s362 + $0x114] sm:$0xf]
        %v768 = vld [vmem:[%s362 + $0x118] sm:$0xf]
        %v769 = vld [vmem:[%s362 + $0x11c] sm:$0xf]
        %v770 = vld [vmem:[%s362 + $0x120] sm:$0xf]
        %v771 = vld [vmem:[%s362 + $0x124] sm:$0xf]
        %v772 = vld [vmem:[%s362 + $0x128] sm:$0xf]
        %v773 = vld [vmem:[%s362 + $0x12c] sm:$0xf]
        %v774 = vld [vmem:[%s362 + $0x130] sm:$0xf]
        %v775 = vld [vmem:[%s362 + $0x134] sm:$0xf]
        %v776 = vld [vmem:[%s362 + $0x138] sm:$0xf]
        %v777 = vld [vmem:[%s362 + $0x13c] sm:$0xf]
        %v858 = vunpack.c.l.b16 %v698
        %v859 = vunpack.c.l.b16 %v699
        %v860 = vunpack.c.l.b16 %v700
        %v861 = vunpack.c.l.b16 %v701
        %v862 = vunpack.c.l.b16 %v702
        %v863 = vunpack.c.l.b16 %v703
        %v864 = vunpack.c.l.b16 %v704
        %v865 = vunpack.c.l.b16 %v705
        %v866 = vunpack.c.l.b16 %v706
        %v867 = vunpack.c.l.b16 %v707
        %v868 = vunpack.c.l.b16 %v708
        %v869 = vunpack.c.l.b16 %v709
        %v870 = vunpack.c.l.b16 %v710
        %v871 = vunpack.c.l.b16 %v711
        %v872 = vunpack.c.l.b16 %v712
        %v873 = vunpack.c.l.b16 %v713
        %v874 = vunpack.c.l.b16 %v714
        %v875 = vunpack.c.l.b16 %v715
        %v876 = vunpack.c.l.b16 %v716
        %v877 = vunpack.c.l.b16 %v717
        %v878 = vunpack.c.l.b16 %v718
        %v879 = vunpack.c.l.b16 %v719
        %v880 = vunpack.c.l.b16 %v720
        %v881 = vunpack.c.l.b16 %v721
        %v882 = vunpack.c.l.b16 %v722
        %v883 = vunpack.c.l.b16 %v723
        %v884 = vunpack.c.l.b16 %v724
        %v885 = vunpack.c.l.b16 %v725
        %v886 = vunpack.c.l.b16 %v726
        %v887 = vunpack.c.l.b16 %v727
        %v888 = vunpack.c.l.b16 %v728
        %v889 = vunpack.c.l.b16 %v729
        %v890 = vunpack.c.l.b16 %v730
        %v891 = vunpack.c.l.b16 %v731
        %v892 = vunpack.c.l.b16 %v732
        %v893 = vunpack.c.l.b16 %v733
        %v894 = vunpack.c.l.b16 %v734
        %v895 = vunpack.c.l.b16 %v735
        %v896 = vunpack.c.l.b16 %v736
        %v897 = vunpack.c.l.b16 %v737
        %v898 = vunpack.c.l.b16 %v738
        %v899 = vunpack.c.l.b16 %v739
        %v900 = vunpack.c.l.b16 %v740
        %v901 = vunpack.c.l.b16 %v741
        %v902 = vunpack.c.l.b16 %v742
        %v903 = vunpack.c.l.b16 %v743
        %v904 = vunpack.c.l.b16 %v744
        %v905 = vunpack.c.l.b16 %v745
        %v906 = vunpack.c.l.b16 %v746
        %v907 = vunpack.c.l.b16 %v747
        %v908 = vunpack.c.l.b16 %v748
        %v909 = vunpack.c.l.b16 %v749
        %v910 = vunpack.c.l.b16 %v750
        %v911 = vunpack.c.l.b16 %v751
        %v912 = vunpack.c.l.b16 %v752
        %v913 = vunpack.c.l.b16 %v753
        %v914 = vunpack.c.l.b16 %v754
        %v915 = vunpack.c.l.b16 %v755
        %v916 = vunpack.c.l.b16 %v756
        %v917 = vunpack.c.l.b16 %v757
        %v918 = vunpack.c.l.b16 %v758
        %v919 = vunpack.c.l.b16 %v759
        %v920 = vunpack.c.l.b16 %v760
        %v921 = vunpack.c.l.b16 %v761
        %v922 = vunpack.c.l.b16 %v762
        %v923 = vunpack.c.l.b16 %v763
        %v924 = vunpack.c.l.b16 %v764
        %v925 = vunpack.c.l.b16 %v765
        %v926 = vunpack.c.l.b16 %v766
        %v927 = vunpack.c.l.b16 %v767
        %v928 = vunpack.c.l.b16 %v768
        %v929 = vunpack.c.l.b16 %v769
        %v930 = vunpack.c.l.b16 %v770
        %v931 = vunpack.c.l.b16 %v771
        %v932 = vunpack.c.l.b16 %v772
        %v933 = vunpack.c.l.b16 %v773
        %v934 = vunpack.c.l.b16 %v774
        %v935 = vunpack.c.l.b16 %v775
        %v936 = vunpack.c.l.b16 %v776
        %v937 = vunpack.c.l.b16 %v777
        %v938 = vpack.c.b16 %v859, %v858
        %v939 = vpack.c.b16 %v861, %v860
        %v940 = vpack.c.b16 %v863, %v862
        %v941 = vpack.c.b16 %v865, %v864
        %v942 = vpack.c.b16 %v867, %v866
        %v943 = vpack.c.b16 %v869, %v868
        %v944 = vpack.c.b16 %v871, %v870
        %v945 = vpack.c.b16 %v873, %v872
        %v946 = vpack.c.b16 %v875, %v874
        %v947 = vpack.c.b16 %v877, %v876
        %v948 = vpack.c.b16 %v879, %v878
        %v949 = vpack.c.b16 %v881, %v880
        %v950 = vpack.c.b16 %v883, %v882
        %v951 = vpack.c.b16 %v885, %v884
        %v952 = vpack.c.b16 %v887, %v886
        %v953 = vpack.c.b16 %v889, %v888
        %v954 = vpack.c.b16 %v891, %v890
        %v955 = vpack.c.b16 %v893, %v892
        %v956 = vpack.c.b16 %v895, %v894
        %v957 = vpack.c.b16 %v897, %v896
        %v958 = vpack.c.b16 %v899, %v898
        %v959 = vpack.c.b16 %v901, %v900
        %v960 = vpack.c.b16 %v903, %v902
        %v961 = vpack.c.b16 %v905, %v904
        %v962 = vpack.c.b16 %v907, %v906
        %v963 = vpack.c.b16 %v909, %v908
        %v964 = vpack.c.b16 %v911, %v910
        %v965 = vpack.c.b16 %v913, %v912
        %v966 = vpack.c.b16 %v915, %v914
        %v967 = vpack.c.b16 %v917, %v916
        %v968 = vpack.c.b16 %v919, %v918
        %v969 = vpack.c.b16 %v921, %v920
        %v970 = vpack.c.b16 %v923, %v922
        %v971 = vpack.c.b16 %v925, %v924
        %v972 = vpack.c.b16 %v927, %v926
        %v973 = vpack.c.b16 %v929, %v928
        %v974 = vpack.c.b16 %v931, %v930
        %v975 = vpack.c.b16 %v933, %v932
        %v976 = vpack.c.b16 %v935, %v934
        %v977 = vpack.c.b16 %v937, %v936
        %1018 = vmatpush.bf16.msra.mxu0 %v945
        %1019 = vmatpush.bf16.msra.mxu0 %v944
        %1020 = vmatpush.bf16.msra.mxu0 %v943
        %1021 = vmatpush.bf16.msra.mxu0 %v942
        %1022 = vmatpush.bf16.msra.mxu0 %v941
        %1023 = vmatpush.bf16.msra.mxu0 %v940
        %1024 = vmatpush.bf16.msra.mxu0 %v939
        %1025 = vmatpush.bf16.msra.mxu0 %v938
        %1026 = vmatmul.bf16.gmra.mxu0 %v628
        %v1027 = vpop.f32.mrf.mxu0
        %v1028 = vadd.f32 0.0, %v1027
        %v1029 = vpop.f32.mrf.mxu0
        %v1030 = vadd.f32 0.0, %v1029
        %1031 = vmatmul.bf16.gmra.mxu0 %v633
        %v1032 = vpop.f32.mrf.mxu0
        %v1033 = vadd.f32 0.0, %v1032
        %v1034 = vpop.f32.mrf.mxu0
        %v1035 = vadd.f32 0.0, %v1034
        %1036 = vmatmul.bf16.gmra.mxu0 %v638
        %v1037 = vpop.f32.mrf.mxu0
        %v1038 = vadd.f32 0.0, %v1037
        %v1039 = vpop.f32.mrf.mxu0
        %v1040 = vadd.f32 0.0, %v1039
        %1041 = vmatmul.bf16.gmra.mxu0 %v643
        %v1042 = vpop.f32.mrf.mxu0
        %v1043 = vadd.f32 0.0, %v1042
        %v1044 = vpop.f32.mrf.mxu0
        %v1045 = vadd.f32 0.0, %v1044
        %1046 = vmatmul.bf16.gmra.mxu0 %v648
        %v1047 = vpop.f32.mrf.mxu0
        %v1048 = vadd.f32 0.0, %v1047
        %v1049 = vpop.f32.mrf.mxu0
        %v1050 = vadd.f32 0.0, %v1049
        %1051 = vmatmul.bf16.gmra.mxu0 %v653
        %v1052 = vpop.f32.mrf.mxu0
        %v1053 = vadd.f32 0.0, %v1052
        %v1054 = vpop.f32.mrf.mxu0
        %v1055 = vadd.f32 0.0, %v1054
        %1056 = vmatmul.bf16.gmra.mxu0 %v658
        %v1057 = vpop.f32.mrf.mxu0
        %v1058 = vadd.f32 0.0, %v1057
        %v1059 = vpop.f32.mrf.mxu0
        %v1060 = vadd.f32 0.0, %v1059
        %1061 = vmatmul.bf16.gmra.mxu0 %v663
        %v1062 = vpop.f32.mrf.mxu0
        %v1063 = vadd.f32 0.0, %v1062
        %v1064 = vpop.f32.mrf.mxu0
        %v1065 = vadd.f32 0.0, %v1064
        %1066 = vmatmul.bf16.gmra.mxu0 %v668
        %v1067 = vpop.f32.mrf.mxu0
        %v1068 = vadd.f32 0.0, %v1067
        %v1069 = vpop.f32.mrf.mxu0
        %v1070 = vadd.f32 0.0, %v1069
        %1071 = vmatmul.bf16.gmra.mxu0 %v673
        %v1072 = vpop.f32.mrf.mxu0
        %v1073 = vadd.f32 0.0, %v1072
        %v1074 = vpop.f32.mrf.mxu0
        %v1075 = vadd.f32 0.0, %v1074
        %1076 = vdwg.mxu0
        %1077 = vmatpush.bf16.msra.mxu0 %v953
        %1078 = vmatpush.bf16.msra.mxu0 %v952
        %1079 = vmatpush.bf16.msra.mxu0 %v951
        %1080 = vmatpush.bf16.msra.mxu0 %v950
        %1081 = vmatpush.bf16.msra.mxu0 %v949
        %1082 = vmatpush.bf16.msra.mxu0 %v948
        %1083 = vmatpush.bf16.msra.mxu0 %v947
        %1084 = vmatpush.bf16.msra.mxu0 %v946
        %1085 = vmatmul.bf16.gmra.mxu0 %v629
        %v1086 = vpop.f32.mrf.mxu0
        %v1087 = vadd.f32 %v1028, %v1086
        %v1088 = vpop.f32.mrf.mxu0
        %v1089 = vadd.f32 %v1030, %v1088
        %1090 = vmatmul.bf16.gmra.mxu0 %v634
        %v1091 = vpop.f32.mrf.mxu0
        %v1092 = vadd.f32 %v1033, %v1091
        %v1093 = vpop.f32.mrf.mxu0
        %v1094 = vadd.f32 %v1035, %v1093
        %1095 = vmatmul.bf16.gmra.mxu0 %v639
        %v1096 = vpop.f32.mrf.mxu0
        %v1097 = vadd.f32 %v1038, %v1096
        %v1098 = vpop.f32.mrf.mxu0
        %v1099 = vadd.f32 %v1040, %v1098
        %1100 = vmatmul.bf16.gmra.mxu0 %v644
        %v1101 = vpop.f32.mrf.mxu0
        %v1102 = vadd.f32 %v1043, %v1101
        %v1103 = vpop.f32.mrf.mxu0
        %v1104 = vadd.f32 %v1045, %v1103
        %1105 = vmatmul.bf16.gmra.mxu0 %v649
        %v1106 = vpop.f32.mrf.mxu0
        %v1107 = vadd.f32 %v1048, %v1106
        %v1108 = vpop.f32.mrf.mxu0
        %v1109 = vadd.f32 %v1050, %v1108
        %1110 = vmatmul.bf16.gmra.mxu0 %v654
        %v1111 = vpop.f32.mrf.mxu0
        %v1112 = vadd.f32 %v1053, %v1111
        %v1113 = vpop.f32.mrf.mxu0
        %v1114 = vadd.f32 %v1055, %v1113
        %1115 = vmatmul.bf16.gmra.mxu0 %v659
        %v1116 = vpop.f32.mrf.mxu0
        %v1117 = vadd.f32 %v1058, %v1116
        %v1118 = vpop.f32.mrf.mxu0
        %v1119 = vadd.f32 %v1060, %v1118
        %1120 = vmatmul.bf16.gmra.mxu0 %v664
        %v1121 = vpop.f32.mrf.mxu0
        %v1122 = vadd.f32 %v1063, %v1121
        %v1123 = vpop.f32.mrf.mxu0
        %v1124 = vadd.f32 %v1065, %v1123
        %1125 = vmatmul.bf16.gmra.mxu0 %v669
        %v1126 = vpop.f32.mrf.mxu0
        %v1127 = vadd.f32 %v1068, %v1126
        %v1128 = vpop.f32.mrf.mxu0
        %v1129 = vadd.f32 %v1070, %v1128
        %1130 = vmatmul.bf16.gmra.mxu0 %v674
        %v1131 = vpop.f32.mrf.mxu0
        %v1132 = vadd.f32 %v1073, %v1131
        %v1133 = vpop.f32.mrf.mxu0
        %v1134 = vadd.f32 %v1075, %v1133
        %1135 = vdwg.mxu0
        %1136 = vmatpush.bf16.msra.mxu0 %v961
        %1137 = vmatpush.bf16.msra.mxu0 %v960
        %1138 = vmatpush.bf16.msra.mxu0 %v959
        %1139 = vmatpush.bf16.msra.mxu0 %v958
        %1140 = vmatpush.bf16.msra.mxu0 %v957
        %1141 = vmatpush.bf16.msra.mxu0 %v956
        %1142 = vmatpush.bf16.msra.mxu0 %v955
        %1143 = vmatpush.bf16.msra.mxu0 %v954
        %1144 = vmatmul.bf16.gmra.mxu0 %v630
        %v1145 = vpop.f32.mrf.mxu0
        %v1146 = vadd.f32 %v1087, %v1145
        %v1147 = vpop.f32.mrf.mxu0
        %v1148 = vadd.f32 %v1089, %v1147
        %1149 = vmatmul.bf16.gmra.mxu0 %v635
        %v1150 = vpop.f32.mrf.mxu0
        %v1151 = vadd.f32 %v1092, %v1150
        %v1152 = vpop.f32.mrf.mxu0
        %v1153 = vadd.f32 %v1094, %v1152
        %1154 = vmatmul.bf16.gmra.mxu0 %v640
        %v1155 = vpop.f32.mrf.mxu0
        %v1156 = vadd.f32 %v1097, %v1155
        %v1157 = vpop.f32.mrf.mxu0
        %v1158 = vadd.f32 %v1099, %v1157
        %1159 = vmatmul.bf16.gmra.mxu0 %v645
        %v1160 = vpop.f32.mrf.mxu0
        %v1161 = vadd.f32 %v1102, %v1160
        %v1162 = vpop.f32.mrf.mxu0
        %v1163 = vadd.f32 %v1104, %v1162
        %1164 = vmatmul.bf16.gmra.mxu0 %v650
        %v1165 = vpop.f32.mrf.mxu0
        %v1166 = vadd.f32 %v1107, %v1165
        %v1167 = vpop.f32.mrf.mxu0
        %v1168 = vadd.f32 %v1109, %v1167
        %1169 = vmatmul.bf16.gmra.mxu0 %v655
        %v1170 = vpop.f32.mrf.mxu0
        %v1171 = vadd.f32 %v1112, %v1170
        %v1172 = vpop.f32.mrf.mxu0
        %v1173 = vadd.f32 %v1114, %v1172
        %1174 = vmatmul.bf16.gmra.mxu0 %v660
        %v1175 = vpop.f32.mrf.mxu0
        %v1176 = vadd.f32 %v1117, %v1175
        %v1177 = vpop.f32.mrf.mxu0
        %v1178 = vadd.f32 %v1119, %v1177
        %1179 = vmatmul.bf16.gmra.mxu0 %v665
        %v1180 = vpop.f32.mrf.mxu0
        %v1181 = vadd.f32 %v1122, %v1180
        %v1182 = vpop.f32.mrf.mxu0
        %v1183 = vadd.f32 %v1124, %v1182
        %1184 = vmatmul.bf16.gmra.mxu0 %v670
        %v1185 = vpop.f32.mrf.mxu0
        %v1186 = vadd.f32 %v1127, %v1185
        %v1187 = vpop.f32.mrf.mxu0
        %v1188 = vadd.f32 %v1129, %v1187
        %1189 = vmatmul.bf16.gmra.mxu0 %v675
        %v1190 = vpop.f32.mrf.mxu0
        %v1191 = vadd.f32 %v1132, %v1190
        %v1192 = vpop.f32.mrf.mxu0
        %v1193 = vadd.f32 %v1134, %v1192
        %1194 = vdwg.mxu0
        %1195 = vmatpush.bf16.msra.mxu0 %v969
        %1196 = vmatpush.bf16.msra.mxu0 %v968
        %1197 = vmatpush.bf16.msra.mxu0 %v967
        %1198 = vmatpush.bf16.msra.mxu0 %v966
        %1199 = vmatpush.bf16.msra.mxu0 %v965
        %1200 = vmatpush.bf16.msra.mxu0 %v964
        %1201 = vmatpush.bf16.msra.mxu0 %v963
        %1202 = vmatpush.bf16.msra.mxu0 %v962
        %1203 = vmatmul.bf16.gmra.mxu0 %v631
        %v1204 = vpop.f32.mrf.mxu0
        %v1205 = vadd.f32 %v1146, %v1204
        %v1206 = vpop.f32.mrf.mxu0
        %v1207 = vadd.f32 %v1148, %v1206
        %1208 = vmatmul.bf16.gmra.mxu0 %v636
        %v1209 = vpop.f32.mrf.mxu0
        %v1210 = vadd.f32 %v1151, %v1209
        %v1211 = vpop.f32.mrf.mxu0
        %v1212 = vadd.f32 %v1153, %v1211
        %1213 = vmatmul.bf16.gmra.mxu0 %v641
        %v1214 = vpop.f32.mrf.mxu0
        %v1215 = vadd.f32 %v1156, %v1214
        %v1216 = vpop.f32.mrf.mxu0
        %v1217 = vadd.f32 %v1158, %v1216
        %1218 = vmatmul.bf16.gmra.mxu0 %v646
        %v1219 = vpop.f32.mrf.mxu0
        %v1220 = vadd.f32 %v1161, %v1219
        %v1221 = vpop.f32.mrf.mxu0
        %v1222 = vadd.f32 %v1163, %v1221
        %1223 = vmatmul.bf16.gmra.mxu0 %v651
        %v1224 = vpop.f32.mrf.mxu0
        %v1225 = vadd.f32 %v1166, %v1224
        %v1226 = vpop.f32.mrf.mxu0
        %v1227 = vadd.f32 %v1168, %v1226
        %1228 = vmatmul.bf16.gmra.mxu0 %v656
        %v1229 = vpop.f32.mrf.mxu0
        %v1230 = vadd.f32 %v1171, %v1229
        %v1231 = vpop.f32.mrf.mxu0
        %v1232 = vadd.f32 %v1173, %v1231
        %1233 = vmatmul.bf16.gmra.mxu0 %v661
        %v1234 = vpop.f32.mrf.mxu0
        %v1235 = vadd.f32 %v1176, %v1234
        %v1236 = vpop.f32.mrf.mxu0
        %v1237 = vadd.f32 %v1178, %v1236
        %1238 = vmatmul.bf16.gmra.mxu0 %v666
        %v1239 = vpop.f32.mrf.mxu0
        %v1240 = vadd.f32 %v1181, %v1239
        %v1241 = vpop.f32.mrf.mxu0
        %v1242 = vadd.f32 %v1183, %v1241
        %1243 = vmatmul.bf16.gmra.mxu0 %v671
        %v1244 = vpop.f32.mrf.mxu0
        %v1245 = vadd.f32 %v1186, %v1244
        %v1246 = vpop.f32.mrf.mxu0
        %v1247 = vadd.f32 %v1188, %v1246
        %1248 = vmatmul.bf16.gmra.mxu0 %v676
        %v1249 = vpop.f32.mrf.mxu0
        %v1250 = vadd.f32 %v1191, %v1249
        %v1251 = vpop.f32.mrf.mxu0
        %v1252 = vadd.f32 %v1193, %v1251
        %1253 = vdwg.mxu0
        %1254 = vmatpush.bf16.msra.mxu0 %v977
        %1255 = vmatpush.bf16.msra.mxu0 %v976
        %1256 = vmatpush.bf16.msra.mxu0 %v975
        %1257 = vmatpush.bf16.msra.mxu0 %v974
        %1258 = vmatpush.bf16.msra.mxu0 %v973
        %1259 = vmatpush.bf16.msra.mxu0 %v972
        %1260 = vmatpush.bf16.msra.mxu0 %v971
        %1261 = vmatpush.bf16.msra.mxu0 %v970
        %1262 = vmatmul.bf16.gmra.mxu0 %v632
        %v1263 = vpop.f32.mrf.mxu0
        %v1264 = vadd.f32 %v1205, %v1263
        %v1265 = vpop.f32.mrf.mxu0
        %v1266 = vadd.f32 %v1207, %v1265
        %1267 = vmatmul.bf16.gmra.mxu0 %v637
        %v1268 = vpop.f32.mrf.mxu0
        %v1269 = vadd.f32 %v1210, %v1268
        %v1270 = vpop.f32.mrf.mxu0
        %v1271 = vadd.f32 %v1212, %v1270
        %1272 = vmatmul.bf16.gmra.mxu0 %v642
        %v1273 = vpop.f32.mrf.mxu0
        %v1274 = vadd.f32 %v1215, %v1273
        %v1275 = vpop.f32.mrf.mxu0
        %v1276 = vadd.f32 %v1217, %v1275
        %1277 = vmatmul.bf16.gmra.mxu0 %v647
        %v1278 = vpop.f32.mrf.mxu0
        %v1279 = vadd.f32 %v1220, %v1278
        %v1280 = vpop.f32.mrf.mxu0
        %v1281 = vadd.f32 %v1222, %v1280
        %1282 = vmatmul.bf16.gmra.mxu0 %v652
        %v1283 = vpop.f32.mrf.mxu0
        %v1284 = vadd.f32 %v1225, %v1283
        %v1285 = vpop.f32.mrf.mxu0
        %v1286 = vadd.f32 %v1227, %v1285
        %1287 = vmatmul.bf16.gmra.mxu0 %v657
        %v1288 = vpop.f32.mrf.mxu0
        %v1289 = vadd.f32 %v1230, %v1288
        %v1290 = vpop.f32.mrf.mxu0
        %v1291 = vadd.f32 %v1232, %v1290
        %1292 = vmatmul.bf16.gmra.mxu0 %v662
        %v1293 = vpop.f32.mrf.mxu0
        %v1294 = vadd.f32 %v1235, %v1293
        %v1295 = vpop.f32.mrf.mxu0
        %v1296 = vadd.f32 %v1237, %v1295
        %1297 = vmatmul.bf16.gmra.mxu0 %v667
        %v1298 = vpop.f32.mrf.mxu0
        %v1299 = vadd.f32 %v1240, %v1298
        %v1300 = vpop.f32.mrf.mxu0
        %v1301 = vadd.f32 %v1242, %v1300
        %1302 = vmatmul.bf16.gmra.mxu0 %v672
        %v1303 = vpop.f32.mrf.mxu0
        %v1304 = vadd.f32 %v1245, %v1303
        %v1305 = vpop.f32.mrf.mxu0
        %v1306 = vadd.f32 %v1247, %v1305
        %1307 = vmatmul.bf16.gmra.mxu0 %v677
        %v1308 = vpop.f32.mrf.mxu0
        %v1309 = vadd.f32 %v1250, %v1308
        %v1310 = vpop.f32.mrf.mxu0
        %v1311 = vadd.f32 %v1252, %v1310
        %1312 = vdwg.mxu0
        %v1313 = vadd.f32 %v678, %v1264
        %v1314 = vadd.f32 %v679, %v1266
        %v1315 = vadd.f32 %v680, %v1269
        %v1316 = vadd.f32 %v681, %v1271
        %v1317 = vadd.f32 %v682, %v1274
        %v1318 = vadd.f32 %v683, %v1276
        %v1319 = vadd.f32 %v684, %v1279
        %v1320 = vadd.f32 %v685, %v1281
        %v1321 = vadd.f32 %v686, %v1284
        %v1322 = vadd.f32 %v687, %v1286
        %v1323 = vadd.f32 %v688, %v1289
        %v1324 = vadd.f32 %v689, %v1291
        %v1325 = vadd.f32 %v690, %v1294
        %v1326 = vadd.f32 %v691, %v1296
        %v1327 = vadd.f32 %v692, %v1299
        %v1328 = vadd.f32 %v693, %v1301
        %v1329 = vadd.f32 %v694, %v1304
        %v1330 = vadd.f32 %v695, %v1306
        %v1331 = vadd.f32 %v696, %v1309
        %v1332 = vadd.f32 %v697, %v1311
        %vm1333 = vcmask 523264
        %1334 = vst.msk [vmem:[#allocation2] sm:$0xff] %vm1333, %v1313
        %1335 = vst.msk [vmem:[#allocation2 + $0x8] sm:$0xff] %vm1333, %v1314
        %1336 = vst.msk [vmem:[#allocation2 + $0x10] sm:$0xff] %vm1333, %v1315
        %1337 = vst.msk [vmem:[#allocation2 + $0x18] sm:$0xff] %vm1333, %v1316
        %1338 = vst.msk [vmem:[#allocation2 + $0x20] sm:$0xff] %vm1333, %v1317
        %1339 = vst.msk [vmem:[#allocation2 + $0x28] sm:$0xff] %vm1333, %v1318
        %1340 = vst.msk [vmem:[#allocation2 + $0x30] sm:$0xff] %vm1333, %v1319
        %1341 = vst.msk [vmem:[#allocation2 + $0x38] sm:$0xff] %vm1333, %v1320
        %1342 = vst.msk [vmem:[#allocation2 + $0x40] sm:$0xff] %vm1333, %v1321
        %1343 = vst.msk [vmem:[#allocation2 + $0x48] sm:$0xff] %vm1333, %v1322
        %1344 = vst.msk [vmem:[#allocation2 + $0x50] sm:$0xff] %vm1333, %v1323
        %1345 = vst.msk [vmem:[#allocation2 + $0x58] sm:$0xff] %vm1333, %v1324
        %1346 = vst.msk [vmem:[#allocation2 + $0x60] sm:$0xff] %vm1333, %v1325
        %1347 = vst.msk [vmem:[#allocation2 + $0x68] sm:$0xff] %vm1333, %v1326
        %1348 = vst.msk [vmem:[#allocation2 + $0x70] sm:$0xff] %vm1333, %v1327
        %1349 = vst.msk [vmem:[#allocation2 + $0x78] sm:$0xff] %vm1333, %v1328
        %1350 = vst.msk [vmem:[#allocation2 + $0x80] sm:$0xff] %vm1333, %v1329
        %1351 = vst.msk [vmem:[#allocation2 + $0x88] sm:$0xff] %vm1333, %v1330
        %1352 = vst.msk [vmem:[#allocation2 + $0x90] sm:$0xff] %vm1333, %v1331
        %1353 = vst.msk [vmem:[#allocation2 + $0x98] sm:$0xff] %vm1333, %v1332
        // Predicated region
        $region53: #{tpu_custom_call.1} parent=47 // pred_check
          %p1354 = pneg %p378
        $region54: #{tpu_custom_call.1} parent=47 // pred_check_branch
          %1356 = sbr.rel (%p1354) target = $region56
        $region55: #{tpu_custom_call.1} parent=47 // pred_region
          %v1357 = vld [vmem:[%s4] sm:$0xf]
          %v1358 = vld [vmem:[%s4 + $0x4] sm:$0xf]
          %v1359 = vld [vmem:[%s4 + $0x8] sm:$0xf]
          %v1360 = vld [vmem:[%s4 + $0xc] sm:$0xf]
          %v1361 = vld [vmem:[%s4 + $0x10] sm:$0xf]
          %v1362 = vld [vmem:[%s4 + $0x14] sm:$0xf]
          %v1363 = vld [vmem:[%s4 + $0x18] sm:$0xf]
          %v1364 = vld [vmem:[%s4 + $0x1c] sm:$0xf]
          %v1365 = vld [vmem:[%s5] sm:$0xf]
          %v1366 = vld [vmem:[%s5 + $0x4] sm:$0xf]
          %v1367 = vld [vmem:[%s5 + $0x8] sm:$0xf]
          %v1368 = vld [vmem:[%s5 + $0xc] sm:$0xf]
          %v1369 = vld [vmem:[%s5 + $0x10] sm:$0xf]
          %v1370 = vld [vmem:[%s5 + $0x14] sm:$0xf]
          %v1371 = vld [vmem:[%s5 + $0x18] sm:$0xf]
          %v1372 = vld [vmem:[%s5 + $0x1c] sm:$0xf]
          %v1373 = vld [vmem:[%s6] sm:$0x1]
          %v1374 = vld [vmem:[#allocation2] sm:$0xff]
          %v1375 = vld [vmem:[#allocation2 + $0x8] sm:$0xff]
          %v1376 = vld [vmem:[#allocation2 + $0x10] sm:$0xff]
          %v1377 = vld [vmem:[#allocation2 + $0x18] sm:$0xff]
          %v1378 = vld [vmem:[#allocation2 + $0x20] sm:$0xff]
          %v1379 = vld [vmem:[#allocation2 + $0x28] sm:$0xff]
          %v1380 = vld [vmem:[#allocation2 + $0x30] sm:$0xff]
          %v1381 = vld [vmem:[#allocation2 + $0x38] sm:$0xff]
          %v1382 = vld [vmem:[#allocation2 + $0x40] sm:$0xff]
          %v1383 = vld [vmem:[#allocation2 + $0x48] sm:$0xff]
          %v1384 = vld [vmem:[#allocation2 + $0x50] sm:$0xff]
          %v1385 = vld [vmem:[#allocation2 + $0x58] sm:$0xff]
          %v1386 = vld [vmem:[#allocation2 + $0x60] sm:$0xff]
          %v1387 = vld [vmem:[#allocation2 + $0x68] sm:$0xff]
          %v1388 = vld [vmem:[#allocation2 + $0x70] sm:$0xff]
          %v1389 = vld [vmem:[#allocation2 + $0x78] sm:$0xff]
          %v1390 = vld [vmem:[#allocation2 + $0x80] sm:$0xff]
          %v1391 = vld [vmem:[#allocation2 + $0x88] sm:$0xff]
          %v1392 = vld [vmem:[#allocation2 + $0x90] sm:$0xff]
          %v1393 = vld [vmem:[#allocation2 + $0x98] sm:$0xff]
          %v1394 = vld [vmem:[%s374] sm:$0xff]
          %v1395 = vld [vmem:[%s374 + $0x8] sm:$0xff]
          %v1396 = vld [vmem:[%s374 + $0x10] sm:$0xff]
          %v1397 = vld [vmem:[%s374 + $0x18] sm:$0xff]
          %v1398 = vld [vmem:[%s374 + $0x20] sm:$0xff]
          %v1399 = vld [vmem:[%s374 + $0x28] sm:$0xff]
          %v1400 = vld [vmem:[%s374 + $0x30] sm:$0xff]
          %v1401 = vld [vmem:[%s374 + $0x38] sm:$0xff]
          %v1402 = vld [vmem:[%s374 + $0x40] sm:$0xff]
          %v1403 = vld [vmem:[%s374 + $0x48] sm:$0xff]
          %v1404 = vld [vmem:[%s374 + $0x50] sm:$0xff]
          %v1405 = vld [vmem:[%s374 + $0x58] sm:$0xff]
          %v1406 = vld [vmem:[%s374 + $0x60] sm:$0xff]
          %v1407 = vld [vmem:[%s374 + $0x68] sm:$0xff]
          %v1408 = vld [vmem:[%s374 + $0x70] sm:$0xff]
          %v1409 = vld [vmem:[%s374 + $0x78] sm:$0xff]
          %v1410 = vld [vmem:[%s374 + $0x80] sm:$0xff]
          %v1411 = vld [vmem:[%s374 + $0x88] sm:$0xff]
          %v1412 = vld [vmem:[%s374 + $0x90] sm:$0xff]
          %v1413 = vld [vmem:[%s374 + $0x98] sm:$0xff]
          %1415 = vset.pattern.permute.xlu0 0
          %1416 = vperm.xlu0 %1415, %v1394
          %v1417 = vpop.permute.xlu0 %1416
          %1420 = vset.pattern.permute.xlu0 0
          %1421 = vperm.xlu0 %1420, %v1395
          %v1422 = vpop.permute.xlu0 %1421
          %1425 = vset.pattern.permute.xlu0 0
          %1426 = vperm.xlu0 %1425, %v1396
          %v1427 = vpop.permute.xlu0 %1426
          %1430 = vset.pattern.permute.xlu0 0
          %1431 = vperm.xlu0 %1430, %v1397
          %v1432 = vpop.permute.xlu0 %1431
          %1435 = vset.pattern.permute.xlu0 0
          %1436 = vperm.xlu0 %1435, %v1398
          %v1437 = vpop.permute.xlu0 %1436
          %1440 = vset.pattern.permute.xlu0 0
          %1441 = vperm.xlu0 %1440, %v1399
          %v1442 = vpop.permute.xlu0 %1441
          %1445 = vset.pattern.permute.xlu0 0
          %1446 = vperm.xlu0 %1445, %v1400
          %v1447 = vpop.permute.xlu0 %1446
          %1450 = vset.pattern.permute.xlu0 0
          %1451 = vperm.xlu0 %1450, %v1401
          %v1452 = vpop.permute.xlu0 %1451
          %1455 = vset.pattern.permute.xlu0 0
          %1456 = vperm.xlu0 %1455, %v1402
          %v1457 = vpop.permute.xlu0 %1456
          %1460 = vset.pattern.permute.xlu0 0
          %1461 = vperm.xlu0 %1460, %v1403
          %v1462 = vpop.permute.xlu0 %1461
          %1465 = vset.pattern.permute.xlu0 0
          %1466 = vperm.xlu0 %1465, %v1404
          %v1467 = vpop.permute.xlu0 %1466
          %1470 = vset.pattern.permute.xlu0 0
          %1471 = vperm.xlu0 %1470, %v1405
          %v1472 = vpop.permute.xlu0 %1471
          %1475 = vset.pattern.permute.xlu0 0
          %1476 = vperm.xlu0 %1475, %v1406
          %v1477 = vpop.permute.xlu0 %1476
          %1480 = vset.pattern.permute.xlu0 0
          %1481 = vperm.xlu0 %1480, %v1407
          %v1482 = vpop.permute.xlu0 %1481
          %1485 = vset.pattern.permute.xlu0 0
          %1486 = vperm.xlu0 %1485, %v1408
          %v1487 = vpop.permute.xlu0 %1486
          %1490 = vset.pattern.permute.xlu0 0
          %1491 = vperm.xlu0 %1490, %v1409
          %v1492 = vpop.permute.xlu0 %1491
          %1495 = vset.pattern.permute.xlu0 0
          %1496 = vperm.xlu0 %1495, %v1410
          %v1497 = vpop.permute.xlu0 %1496
          %1500 = vset.pattern.permute.xlu0 0
          %1501 = vperm.xlu0 %1500, %v1411
          %v1502 = vpop.permute.xlu0 %1501
          %1505 = vset.pattern.permute.xlu0 0
          %1506 = vperm.xlu0 %1505, %v1412
          %v1507 = vpop.permute.xlu0 %1506
          %1510 = vset.pattern.permute.xlu0 0
          %1511 = vperm.xlu0 %1510, %v1413
          %v1512 = vpop.permute.xlu0 %1511
          %v1514 = vmul.f32 %v1374, %v1417
          %v1515 = vmul.f32 %v1375, %v1422
          %v1516 = vmul.f32 %v1376, %v1427
          %v1517 = vmul.f32 %v1377, %v1432
          %v1518 = vmul.f32 %v1378, %v1437
          %v1519 = vmul.f32 %v1379, %v1442
          %v1520 = vmul.f32 %v1380, %v1447
          %v1521 = vmul.f32 %v1381, %v1452
          %v1522 = vmul.f32 %v1382, %v1457
          %v1523 = vmul.f32 %v1383, %v1462
          %v1524 = vmul.f32 %v1384, %v1467
          %v1525 = vmul.f32 %v1385, %v1472
          %v1526 = vmul.f32 %v1386, %v1477
          %v1527 = vmul.f32 %v1387, %v1482
          %v1528 = vmul.f32 %v1388, %v1487
          %v1529 = vmul.f32 %v1389, %v1492
          %v1530 = vmul.f32 %v1390, %v1497
          %v1531 = vmul.f32 %v1391, %v1502
          %v1532 = vmul.f32 %v1392, %v1507
          %v1533 = vmul.f32 %v1393, %v1512
          %v1534 = vpack.c.bf16 %v1515, %v1514
          %v1535 = vpack.c.bf16 %v1517, %v1516
          %v1536 = vpack.c.bf16 %v1519, %v1518
          %v1537 = vpack.c.bf16 %v1521, %v1520
          %v1538 = vpack.c.bf16 %v1523, %v1522
          %v1539 = vpack.c.bf16 %v1525, %v1524
          %v1540 = vpack.c.bf16 %v1527, %v1526
          %v1541 = vpack.c.bf16 %v1529, %v1528
          %v1542 = vpack.c.bf16 %v1531, %v1530
          %v1543 = vpack.c.bf16 %v1533, %v1532
          %v1544 = vld [vmem:[%s368] sm:$0xf]
          %v1545 = vld [vmem:[%s368 + $0x4] sm:$0xf]
          %v1546 = vld [vmem:[%s368 + $0x8] sm:$0xf]
          %v1547 = vld [vmem:[%s368 + $0xc] sm:$0xf]
          %v1548 = vld [vmem:[%s368 + $0x10] sm:$0xf]
          %v1549 = vld [vmem:[%s368 + $0x14] sm:$0xf]
          %v1550 = vld [vmem:[%s368 + $0x18] sm:$0xf]
          %v1551 = vld [vmem:[%s368 + $0x1c] sm:$0xf]
          %v1552 = vld [vmem:[%s368 + $0x20] sm:$0xf]
          %v1553 = vld [vmem:[%s368 + $0x24] sm:$0xf]
          %v1554 = vld [vmem:[%s368 + $0x28] sm:$0xf]
          %v1555 = vld [vmem:[%s368 + $0x2c] sm:$0xf]
          %v1556 = vld [vmem:[%s368 + $0x30] sm:$0xf]
          %v1557 = vld [vmem:[%s368 + $0x34] sm:$0xf]
          %v1558 = vld [vmem:[%s368 + $0x38] sm:$0xf]
          %v1559 = vld [vmem:[%s368 + $0x3c] sm:$0xf]
          %v1560 = vld [vmem:[%s368 + $0x40] sm:$0xf]
          %v1561 = vld [vmem:[%s368 + $0x44] sm:$0xf]
          %v1562 = vld [vmem:[%s368 + $0x48] sm:$0xf]
          %v1563 = vld [vmem:[%s368 + $0x4c] sm:$0xf]
          %v1584 = vunpack.c.l.b16 %v1544
          %v1585 = vunpack.c.l.b16 %v1545
          %v1586 = vunpack.c.l.b16 %v1546
          %v1587 = vunpack.c.l.b16 %v1547
          %v1588 = vunpack.c.l.b16 %v1548
          %v1589 = vunpack.c.l.b16 %v1549
          %v1590 = vunpack.c.l.b16 %v1550
          %v1591 = vunpack.c.l.b16 %v1551
          %v1592 = vunpack.c.l.b16 %v1552
          %v1593 = vunpack.c.l.b16 %v1553
          %v1594 = vunpack.c.l.b16 %v1554
          %v1595 = vunpack.c.l.b16 %v1555
          %v1596 = vunpack.c.l.b16 %v1556
          %v1597 = vunpack.c.l.b16 %v1557
          %v1598 = vunpack.c.l.b16 %v1558
          %v1599 = vunpack.c.l.b16 %v1559
          %v1600 = vunpack.c.l.b16 %v1560
          %v1601 = vunpack.c.l.b16 %v1561
          %v1602 = vunpack.c.l.b16 %v1562
          %v1603 = vunpack.c.l.b16 %v1563
          %v1604 = vpack.c.b16 %v1585, %v1584
          %v1605 = vpack.c.b16 %v1587, %v1586
          %v1606 = vpack.c.b16 %v1589, %v1588
          %v1607 = vpack.c.b16 %v1591, %v1590
          %v1608 = vpack.c.b16 %v1593, %v1592
          %v1609 = vpack.c.b16 %v1595, %v1594
          %v1610 = vpack.c.b16 %v1597, %v1596
          %v1611 = vpack.c.b16 %v1599, %v1598
          %v1612 = vpack.c.b16 %v1601, %v1600
          %v1613 = vpack.c.b16 %v1603, %v1602
          %v1622 = vunpack.c.l.b16 %v1365
          %v1623 = vunpack.c.l.b16 %v1366
          %v1624 = vunpack.c.l.b16 %v1367
          %v1625 = vunpack.c.l.b16 %v1368
          %v1626 = vunpack.c.l.b16 %v1369
          %v1627 = vunpack.c.l.b16 %v1370
          %v1628 = vunpack.c.l.b16 %v1371
          %v1629 = vunpack.c.l.b16 %v1372
          %v1630 = vpack.c.b16 %v1623, %v1622
          %v1631 = vpack.c.b16 %v1625, %v1624
          %v1632 = vpack.c.b16 %v1627, %v1626
          %v1633 = vpack.c.b16 %v1629, %v1628
          %v1639 = vsel %vm1333, %v1604, 0
          %v1642 = vsel %vm1333, %v1605, 0
          %v1645 = vsel %vm1333, %v1606, 0
          %v1648 = vsel %vm1333, %v1607, 0
          %v1651 = vsel %vm1333, %v1608, 0
          %v1654 = vsel %vm1333, %v1609, 0
          %v1657 = vsel %vm1333, %v1610, 0
          %v1660 = vsel %vm1333, %v1611, 0
          %v1663 = vsel %vm1333, %v1612, 0
          %v1666 = vsel %vm1333, %v1613, 0
          %1668 = vmatpush.bf16.msra.mxu0 0
          %1669 = vmatpush.bf16.msra.mxu0 0
          %1670 = vmatpush.bf16.msra.mxu0 0
          %1671 = vmatpush.bf16.msra.mxu0 0
          %1672 = vmatpush.bf16.msra.mxu0 %v1633
          %1673 = vmatpush.bf16.msra.mxu0 %v1632
          %1674 = vmatpush.bf16.msra.mxu0 %v1631
          %1675 = vmatpush.bf16.msra.mxu0 %v1630
          %1676 = vmatmul.bf16.gmra.mxu0 %v1639
          %v1677 = vpop.f32.mrf.mxu0
          %v1678 = vadd.f32 0.0, %v1677
          %v1679 = vpop.f32.mrf.mxu0
          %v1680 = vadd.f32 0.0, %v1679
          %1681 = vmatmul.bf16.gmra.mxu0 %v1642
          %v1682 = vpop.f32.mrf.mxu0
          %v1683 = vadd.f32 0.0, %v1682
          %v1684 = vpop.f32.mrf.mxu0
          %v1685 = vadd.f32 0.0, %v1684
          %1686 = vmatmul.bf16.gmra.mxu0 %v1645
          %v1687 = vpop.f32.mrf.mxu0
          %v1688 = vadd.f32 0.0, %v1687
          %v1689 = vpop.f32.mrf.mxu0
          %v1690 = vadd.f32 0.0, %v1689
          %1691 = vmatmul.bf16.gmra.mxu0 %v1648
          %v1692 = vpop.f32.mrf.mxu0
          %v1693 = vadd.f32 0.0, %v1692
          %v1694 = vpop.f32.mrf.mxu0
          %v1695 = vadd.f32 0.0, %v1694
          %1696 = vmatmul.bf16.gmra.mxu0 %v1651
          %v1697 = vpop.f32.mrf.mxu0
          %v1698 = vadd.f32 0.0, %v1697
          %v1699 = vpop.f32.mrf.mxu0
          %v1700 = vadd.f32 0.0, %v1699
          %1701 = vmatmul.bf16.gmra.mxu0 %v1654
          %v1702 = vpop.f32.mrf.mxu0
          %v1703 = vadd.f32 0.0, %v1702
          %v1704 = vpop.f32.mrf.mxu0
          %v1705 = vadd.f32 0.0, %v1704
          %1706 = vmatmul.bf16.gmra.mxu0 %v1657
          %v1707 = vpop.f32.mrf.mxu0
          %v1708 = vadd.f32 0.0, %v1707
          %v1709 = vpop.f32.mrf.mxu0
          %v1710 = vadd.f32 0.0, %v1709
          %1711 = vmatmul.bf16.gmra.mxu0 %v1660
          %v1712 = vpop.f32.mrf.mxu0
          %v1713 = vadd.f32 0.0, %v1712
          %v1714 = vpop.f32.mrf.mxu0
          %v1715 = vadd.f32 0.0, %v1714
          %1716 = vmatmul.bf16.gmra.mxu0 %v1663
          %v1717 = vpop.f32.mrf.mxu0
          %v1718 = vadd.f32 0.0, %v1717
          %v1719 = vpop.f32.mrf.mxu0
          %v1720 = vadd.f32 0.0, %v1719
          %1721 = vmatmul.bf16.gmra.mxu0 %v1666
          %v1722 = vpop.f32.mrf.mxu0
          %v1723 = vadd.f32 0.0, %v1722
          %v1724 = vpop.f32.mrf.mxu0
          %v1725 = vadd.f32 0.0, %v1724
          %1726 = vdwg.mxu0
          %v1735 = vunpack.c.l.b16 %v1357
          %v1736 = vunpack.c.l.b16 %v1358
          %v1737 = vunpack.c.l.b16 %v1359
          %v1738 = vunpack.c.l.b16 %v1360
          %v1739 = vunpack.c.l.b16 %v1361
          %v1740 = vunpack.c.l.b16 %v1362
          %v1741 = vunpack.c.l.b16 %v1363
          %v1742 = vunpack.c.l.b16 %v1364
          %v1743 = vpack.c.b16 %v1736, %v1735
          %v1744 = vpack.c.b16 %v1738, %v1737
          %v1745 = vpack.c.b16 %v1740, %v1739
          %v1746 = vpack.c.b16 %v1742, %v1741
          %v1752 = vsel %vm1333, %v1534, 0
          %v1755 = vsel %vm1333, %v1535, 0
          %v1758 = vsel %vm1333, %v1536, 0
          %v1761 = vsel %vm1333, %v1537, 0
          %v1764 = vsel %vm1333, %v1538, 0
          %v1767 = vsel %vm1333, %v1539, 0
          %v1770 = vsel %vm1333, %v1540, 0
          %v1773 = vsel %vm1333, %v1541, 0
          %v1776 = vsel %vm1333, %v1542, 0
          %v1779 = vsel %vm1333, %v1543, 0
          %1781 = vmatpush.bf16.msra.mxu0 0
          %1782 = vmatpush.bf16.msra.mxu0 0
          %1783 = vmatpush.bf16.msra.mxu0 0
          %1784 = vmatpush.bf16.msra.mxu0 0
          %1785 = vmatpush.bf16.msra.mxu0 %v1746
          %1786 = vmatpush.bf16.msra.mxu0 %v1745
          %1787 = vmatpush.bf16.msra.mxu0 %v1744
          %1788 = vmatpush.bf16.msra.mxu0 %v1743
          %1789 = vmatmul.bf16.gmra.mxu0 %v1752
          %v1790 = vpop.f32.mrf.mxu0
          %v1791 = vadd.f32 %v1678, %v1790
          %v1792 = vpop.f32.mrf.mxu0
          %v1793 = vadd.f32 %v1680, %v1792
          %1794 = vmatmul.bf16.gmra.mxu0 %v1755
          %v1795 = vpop.f32.mrf.mxu0
          %v1796 = vadd.f32 %v1683, %v1795
          %v1797 = vpop.f32.mrf.mxu0
          %v1798 = vadd.f32 %v1685, %v1797
          %1799 = vmatmul.bf16.gmra.mxu0 %v1758
          %v1800 = vpop.f32.mrf.mxu0
          %v1801 = vadd.f32 %v1688, %v1800
          %v1802 = vpop.f32.mrf.mxu0
          %v1803 = vadd.f32 %v1690, %v1802
          %1804 = vmatmul.bf16.gmra.mxu0 %v1761
          %v1805 = vpop.f32.mrf.mxu0
          %v1806 = vadd.f32 %v1693, %v1805
          %v1807 = vpop.f32.mrf.mxu0
          %v1808 = vadd.f32 %v1695, %v1807
          %1809 = vmatmul.bf16.gmra.mxu0 %v1764
          %v1810 = vpop.f32.mrf.mxu0
          %v1811 = vadd.f32 %v1698, %v1810
          %v1812 = vpop.f32.mrf.mxu0
          %v1813 = vadd.f32 %v1700, %v1812
          %1814 = vmatmul.bf16.gmra.mxu0 %v1767
          %v1815 = vpop.f32.mrf.mxu0
          %v1816 = vadd.f32 %v1703, %v1815
          %v1817 = vpop.f32.mrf.mxu0
          %v1818 = vadd.f32 %v1705, %v1817
          %1819 = vmatmul.bf16.gmra.mxu0 %v1770
          %v1820 = vpop.f32.mrf.mxu0
          %v1821 = vadd.f32 %v1708, %v1820
          %v1822 = vpop.f32.mrf.mxu0
          %v1823 = vadd.f32 %v1710, %v1822
          %1824 = vmatmul.bf16.gmra.mxu0 %v1773
          %v1825 = vpop.f32.mrf.mxu0
          %v1826 = vadd.f32 %v1713, %v1825
          %v1827 = vpop.f32.mrf.mxu0
          %v1828 = vadd.f32 %v1715, %v1827
          %1829 = vmatmul.bf16.gmra.mxu0 %v1776
          %v1830 = vpop.f32.mrf.mxu0
          %v1831 = vadd.f32 %v1718, %v1830
          %v1832 = vpop.f32.mrf.mxu0
          %v1833 = vadd.f32 %v1720, %v1832
          %1834 = vmatmul.bf16.gmra.mxu0 %v1779
          %v1835 = vpop.f32.mrf.mxu0
          %v1836 = vadd.f32 %v1723, %v1835
          %v1837 = vpop.f32.mrf.mxu0
          %v1838 = vadd.f32 %v1725, %v1837
          %1839 = vdwg.mxu0
          %v1841 = vperm.slane %v1373, 0
          %v1843 = vadd.f32 %v1791, %v1841
          %v1844 = vadd.f32 %v1793, %v1841
          %v1845 = vadd.f32 %v1796, %v1841
          %v1846 = vadd.f32 %v1798, %v1841
          %v1847 = vadd.f32 %v1801, %v1841
          %v1848 = vadd.f32 %v1803, %v1841
          %v1849 = vadd.f32 %v1806, %v1841
          %v1850 = vadd.f32 %v1808, %v1841
          %v1851 = vadd.f32 %v1811, %v1841
          %v1852 = vadd.f32 %v1813, %v1841
          %v1853 = vadd.f32 %v1816, %v1841
          %v1854 = vadd.f32 %v1818, %v1841
          %v1855 = vadd.f32 %v1821, %v1841
          %v1856 = vadd.f32 %v1823, %v1841
          %v1857 = vadd.f32 %v1826, %v1841
          %v1858 = vadd.f32 %v1828, %v1841
          %v1859 = vadd.f32 %v1831, %v1841
          %v1860 = vadd.f32 %v1833, %v1841
          %v1861 = vadd.f32 %v1836, %v1841
          %v1862 = vadd.f32 %v1838, %v1841
          %v1863 = vmax.f32 %v1843, 0.0
          %v1864 = vmax.f32 %v1844, 0.0
          %v1865 = vmax.f32 %v1845, 0.0
          %v1866 = vmax.f32 %v1846, 0.0
          %v1867 = vmax.f32 %v1847, 0.0
          %v1868 = vmax.f32 %v1848, 0.0
          %v1869 = vmax.f32 %v1849, 0.0
          %v1870 = vmax.f32 %v1850, 0.0
          %v1871 = vmax.f32 %v1851, 0.0
          %v1872 = vmax.f32 %v1852, 0.0
          %v1873 = vmax.f32 %v1853, 0.0
          %v1874 = vmax.f32 %v1854, 0.0
          %v1875 = vmax.f32 %v1855, 0.0
          %v1876 = vmax.f32 %v1856, 0.0
          %v1877 = vmax.f32 %v1857, 0.0
          %v1878 = vmax.f32 %v1858, 0.0
          %v1879 = vmax.f32 %v1859, 0.0
          %v1880 = vmax.f32 %v1860, 0.0
          %v1881 = vmax.f32 %v1861, 0.0
          %v1882 = vmax.f32 %v1862, 0.0
          %v1883 = vpack.c.bf16 %v1863, %v1863
          %v1884 = vpack.c.bf16 %v1864, %v1864
          %v1885 = vpack.c.bf16 %v1865, %v1865
          %v1886 = vpack.c.bf16 %v1866, %v1866
          %v1887 = vpack.c.bf16 %v1867, %v1867
          %v1888 = vpack.c.bf16 %v1868, %v1868
          %v1889 = vpack.c.bf16 %v1869, %v1869
          %v1890 = vpack.c.bf16 %v1870, %v1870
          %v1891 = vpack.c.bf16 %v1871, %v1871
          %v1892 = vpack.c.bf16 %v1872, %v1872
          %v1893 = vpack.c.bf16 %v1873, %v1873
          %v1894 = vpack.c.bf16 %v1874, %v1874
          %v1895 = vpack.c.bf16 %v1875, %v1875
          %v1896 = vpack.c.bf16 %v1876, %v1876
          %v1897 = vpack.c.bf16 %v1877, %v1877
          %v1898 = vpack.c.bf16 %v1878, %v1878
          %v1899 = vpack.c.bf16 %v1879, %v1879
          %v1900 = vpack.c.bf16 %v1880, %v1880
          %v1901 = vpack.c.bf16 %v1881, %v1881
          %v1902 = vpack.c.bf16 %v1882, %v1882
          %1903 = vst [vmem:[%s345] sm:$0xf] %v1883
          %1904 = vst [vmem:[%s345 + $0x4] sm:$0xf] %v1884
          %1905 = vst [vmem:[%s345 + $0x8] sm:$0xf] %v1885
          %1906 = vst [vmem:[%s345 + $0xc] sm:$0xf] %v1886
          %1907 = vst [vmem:[%s345 + $0x10] sm:$0xf] %v1887
          %1908 = vst [vmem:[%s345 + $0x14] sm:$0xf] %v1888
          %1909 = vst [vmem:[%s345 + $0x18] sm:$0xf] %v1889
          %1910 = vst [vmem:[%s345 + $0x1c] sm:$0xf] %v1890
          %1911 = vst [vmem:[%s345 + $0x20] sm:$0xf] %v1891
          %1912 = vst [vmem:[%s345 + $0x24] sm:$0xf] %v1892
          %1913 = vst [vmem:[%s345 + $0x28] sm:$0xf] %v1893
          %1914 = vst [vmem:[%s345 + $0x2c] sm:$0xf] %v1894
          %1915 = vst [vmem:[%s345 + $0x30] sm:$0xf] %v1895
          %1916 = vst [vmem:[%s345 + $0x34] sm:$0xf] %v1896
          %1917 = vst [vmem:[%s345 + $0x38] sm:$0xf] %v1897
          %1918 = vst [vmem:[%s345 + $0x3c] sm:$0xf] %v1898
          %1919 = vst [vmem:[%s345 + $0x40] sm:$0xf] %v1899
          %1920 = vst [vmem:[%s345 + $0x44] sm:$0xf] %v1900
          %1921 = vst [vmem:[%s345 + $0x48] sm:$0xf] %v1901
          %1922 = vst [vmem:[%s345 + $0x4c] sm:$0xf] %v1902
        $region56: #{tpu_custom_call.1} parent=47 // pred_fallthru
          _
        %s1923 = sand.u32 %s210, 1
        %s1924 = scalar_lea.sflag [#allocation4], %s1923
        %s1925 = sand.u32 %s210, 1
        %s1926 = smul.addr %s1925, 80
        %s1927 = scalar_lea.vmem [#allocation3], %s1926
        // Predicated region
        $region57: #{tpu_custom_call.1} parent=47 // pred_check
          %p1928 = pneg %p220
        $region58: #{tpu_custom_call.1} parent=47 // pred_check_branch
          %1930 = sbr.rel (%p1928) target = $region60
        $region59: #{tpu_custom_call.1} parent=47 // pred_region
          %s1931 = smul.u32 20, %s25
          %1933 = vsyncadd %s1924, 0
          %s1934 = smul.addr %s1931, 4
          %s1935 = scalar_lea.hbm %s7, %s1934
          %s1936 = sshll.u32 %s1927, 4
          %s1937 = int_to_ptr.vmem [resolvable:$true] %s1936
          %s1938 = sshll.u32 %s1935, 4
          %s1939 = int_to_ptr.hbm [resolvable:$true] %s1938
          %1944 = dma.vmem_to_hbm [thread:$0]  %s1937, 1280, %s1939, %s1924, 64, 64, 4
        $region60: #{tpu_custom_call.1} parent=47 // pred_fallthru
          _
      $region48: #{tpu_custom_call.1} parent=5 // pred_fallthru
        _
      %p1945 = scmp.le.s32.totalorder 2, %s16
      // Predicated region
      $region61: #{tpu_custom_call.1} parent=5 // pred_check
        %p1946 = pneg %p1945
      $region62: #{tpu_custom_call.1} parent=5 // pred_check_branch
        %1948 = sbr.rel (%p1946) target = $region64
      $region63: #{tpu_custom_call.1} parent=5 // pred_region
        %s1949 = ssub.s32 %s16, 2
        // Predicated region
        $region65: #{tpu_custom_call.1} parent=63 // pred_check
          %p1950 = pneg %p226
        $region66: #{tpu_custom_call.1} parent=63 // pred_check_branch
          %1952 = sbr.rel (%p1950) target = $region68
        $region67: #{tpu_custom_call.1} parent=63 // pred_region
          %s1953 = sand.u32 %s211, 1
          %s1954 = scalar_lea.sflag [#allocation4], %s1953
          %s1955 = sand.u32 %s211, 1
          %s1956 = smul.addr %s1955, 80
          %s1957 = scalar_lea.vmem [#allocation3], %s1956
          %1959 = dma.done %s1954, 1280
        $region68: #{tpu_custom_call.1} parent=63 // pred_fallthru
          _
      $region64: #{tpu_custom_call.1} parent=5 // pred_fallthru
        _
    $region6: #{tpu_custom_call.1} parent=1 // loop_footer
      %s20 = sadd.s32 1, %s16
    $region7: #{tpu_custom_call.1} parent=1 // loop_footer_branch
      %15 = sbr.rel target = $region3
    $region8: #{tpu_custom_call.1} parent=1 // loop_exit
      _
    %1960 = vsyncpa [#allocation4], 1
    %s1961 = scalar_lea.sflag [#allocation4], 1
    %1962 = vsyncpa %s1961, 1

</llo_original>
